<compile_context>
chip_gen: v6e
topology: v6e:2x2x1
jax: 0.10.0
libtpu: 0.0.40
codegen_flags: <defaults>
</compile_context>

<pallas_src>
from functools import partial

import jax
import jax.numpy as jnp
from jax.experimental import pallas as pl
from jax.experimental.pallas import tpu as pltpu

BN_EPS = 1e-5
INTER_PAD = 128       # inter_dim padded to one full lane group
OUT_PAD = 128         # oup_dim padded to one full lane group
NODE_PAD = 128        # node axis padded to a multiple of this (lane-dense A)
NUM_CONV = 4
NEG_INF = -1e30       # fills padded logit lanes so log_softmax ignores them


# --------------------------------------------------------------------------
# Kernel
# --------------------------------------------------------------------------
def graphsage_kernel(adj_ref, invdeg_ref, x0_ref, w_ref, b_ref, out_ref):
  """adj   : (Np,Np) bf16 EXACT edge counts (no normalization baked in).
     invdeg: (Np,1)  f32 per-row 1/max(deg,1).
     x0    : (Np,128) bf16 zero-padded node features.
     w     : (4*256 + 3*128, 128) bf16 weight slab
             [conv1..conv4: (W_l'; W_r') fused 256x128 blocks][lin1][lin2][lin3]
     b     : (8,128) f32 bias slab (BN folded; row 6 pads logits with -1e30).
     out   : (Np,128) f32 log-probabilities (lanes >= oup_dim and rows >= N are
             junk, sliced off in the wrapper)."""
  adj = adj_ref[...]                           # (Np, Np)  bf16
  inv_deg = invdeg_ref[...]                    # (Np, 1)   f32
  x = x0_ref[...]                              # (Np, 128) bf16

  # ---- 4 x (SAGEConv + folded BN + ReLU); dropout is identity in eval. ----
  for l in range(NUM_CONV):
    w = w_ref[l * 2 * INTER_PAD:(l + 1) * 2 * INTER_PAD, :]   # (256, 128) bf16
    b = b_ref[l:l + 1, :]                                     # (1, 128)   f32
    # Mean aggregation: exact integer counts @ x, then f32 row scale (VPU mul
    # hides under the MXU) -> no bf16 rounding of the 1/deg weights.
    agg = jnp.dot(adj, x, preferred_element_type=jnp.float32) * inv_deg
    agg = agg.astype(jnp.bfloat16)
    h_in = jnp.concatenate([agg, x], axis=-1)                 # (Np, 256) bf16
    h = jnp.dot(h_in, w, preferred_element_type=jnp.float32) + b
    x = jnp.maximum(h, 0.0).astype(jnp.bfloat16)

  # ---- MLP head: lin1 -> ReLU -> lin2 -> lin3 ----
  base = NUM_CONV * 2 * INTER_PAD
  w1 = w_ref[base:base + INTER_PAD, :]
  w2 = w_ref[base + INTER_PAD:base + 2 * INTER_PAD, :]
  w3 = w_ref[base + 2 * INTER_PAD:base + 3 * INTER_PAD, :]
  b1 = b_ref[4:5, :]
  b2 = b_ref[5:6, :]
  b3 = b_ref[6:7, :]

  h = jnp.dot(x, w1, preferred_element_type=jnp.float32) + b1
  x = jnp.maximum(h, 0.0).astype(jnp.bfloat16)
  h = jnp.dot(x, w2, preferred_element_type=jnp.float32) + b2
  x = h.astype(jnp.bfloat16)
  h = jnp.dot(x, w3, preferred_element_type=jnp.float32) + b3  # pads -> -1e30

  # ---- log_softmax over last dim (padded lanes: exp(-1e30 - m) == 0) ----
  m = jnp.max(h, axis=-1, keepdims=True)
  z = h - m
  lse = jnp.log(jnp.sum(jnp.exp(z), axis=-1, keepdims=True))
  out_ref[...] = z - lse


# --------------------------------------------------------------------------
# Host-side wrapper (jit-ed: pad/cast/call/slice fuse into one dispatch)
# --------------------------------------------------------------------------
@partial(jax.jit, static_argnames=("oup_dim",))
def graphsage_forward(adj_counts, inv_deg, pos, w_slab, b_slab, *, oup_dim):
  # The -1e30 padded-logit trick requires slicing back below OUT_PAD lanes.
  assert 0 < oup_dim < OUT_PAD, "oup_dim must be < 128 for padded log_softmax"

  n = pos.shape[0]
  n_pad = ((n + NODE_PAD - 1) // NODE_PAD) * NODE_PAD   # lane-dense node axis

  # Zero-pad node features / adjacency / inv_deg to lane-dense shapes.
  x0 = (jnp.zeros((n_pad, INTER_PAD), jnp.bfloat16)
        .at[:n, :pos.shape[1]].set(pos.astype(jnp.bfloat16)))
  adj = (jnp.zeros((n_pad, n_pad), jnp.bfloat16)
         .at[:n, :n].set(adj_counts.astype(jnp.bfloat16)))
  idg = jnp.zeros((n_pad, 1), jnp.float32).at[:n, :].set(inv_deg)

  # Explicit VMEM budget: actual footprint + headroom, capped well below v7x's
  # 64 MiB physical VMEM (v5e/v6e scoped defaults are only 16/32 MiB).
  footprint = (adj.size * 2 + x0.size * 2 + idg.size * 4 +
               w_slab.size * 2 + b_slab.size * 4 + n_pad * OUT_PAD * 4)
  vmem_limit = int(min(max(4 * footprint, 16 * 1024 * 1024), 48 * 1024 * 1024))

  vmem = pl.BlockSpec(memory_space=pltpu.MemorySpace.VMEM)
  out = pl.pallas_call(
      graphsage_kernel,
      out_shape=jax.ShapeDtypeStruct((n_pad, OUT_PAD), jnp.float32),
      in_specs=[vmem, vmem, vmem, vmem, vmem],
      out_specs=vmem,
      compiler_params=pltpu.CompilerParams(vmem_limit_bytes=vmem_limit),
  )(adj, idg, x0, w_slab, b_slab)
  return out[:n, :oup_dim]


# --------------------------------------------------------------------------
# Parameter construction (synthetic) + BN folding / packing
# --------------------------------------------------------------------------
def build_raw_params(key, inp_dim, inter_dim, oup_dim):
  """Deterministic synthetic params in module layout (weights already (in,out))."""
  convs = []
  for d_in in [inp_dim, inter_dim, inter_dim, inter_dim]:
    key, k1, k2, k3, k4, k5, k6, k7 = jax.random.split(key, 8)
    convs.append(dict(
        w_l=jax.random.normal(k1, (d_in, inter_dim), jnp.float32) * 0.2,
        b_l=jax.random.normal(k2, (inter_dim,), jnp.float32) * 0.05,
        w_r=jax.random.normal(k3, (d_in, inter_dim), jnp.float32) * 0.2,
        gamma=1.0 + 0.1 * jax.random.normal(k4, (inter_dim,), jnp.float32),
        beta=0.05 * jax.random.normal(k5, (inter_dim,), jnp.float32),
        rmean=0.05 * jax.random.normal(k6, (inter_dim,), jnp.float32),
        rvar=0.5 + jnp.abs(jax.random.normal(k7, (inter_dim,), jnp.float32)) * 0.5,
    ))
  key, k1, k2, k3, k4, k5, k6 = jax.random.split(key, 7)
  lins = [
      (jax.random.normal(k1, (inter_dim, inter_dim), jnp.float32) * 0.2,
       jax.random.normal(k2, (inter_dim,), jnp.float32) * 0.05),
      (jax.random.normal(k3, (inter_dim, inter_dim), jnp.float32) * 0.2,
       jax.random.normal(k4, (inter_dim,), jnp.float32) * 0.05),
      (jax.random.normal(k5, (inter_dim, oup_dim), jnp.float32) * 0.2,
       jax.random.normal(k6, (oup_dim,), jnp.float32) * 0.05),
  ]
  return convs, lins


def fold_and_pack(convs, lins, inter_dim, oup_dim):
  """Fold BN (eval) into weights/bias, fuse lin_l+lin_r, pad to 128 lanes and
  pack everything into a single bf16 weight slab + a single f32 bias slab."""
  w_blocks = []
  b_rows = []
  for c in convs:
    d_in = c['w_l'].shape[0]
    scale = c['gamma'] * jax.lax.rsqrt(c['rvar'] + BN_EPS)          # (inter,)
    w_l = c['w_l'] * scale[None, :]
    w_r = c['w_r'] * scale[None, :]
    bias = (c['b_l'] - c['rmean']) * scale + c['beta']
    wl_p = jnp.zeros((INTER_PAD, INTER_PAD), jnp.float32)
    wl_p = wl_p.at[:d_in, :inter_dim].set(w_l)
    wr_p = jnp.zeros((INTER_PAD, INTER_PAD), jnp.float32)
    wr_p = wr_p.at[:d_in, :inter_dim].set(w_r)
    w_blocks.append(jnp.concatenate([wl_p, wr_p], axis=0))          # (256, 128)
    b_rows.append(jnp.zeros((INTER_PAD,), jnp.float32).at[:inter_dim].set(bias))

  for i, (w, b) in enumerate(lins):
    d_in, d_out = w.shape
    w_p = jnp.zeros((INTER_PAD, INTER_PAD), jnp.float32).at[:d_in, :d_out].set(w)
    if i == 2:  # final projection: padded logit lanes get a huge negative bias
      b_p = jnp.full((INTER_PAD,), NEG_INF, jnp.float32).at[:d_out].set(b)
    else:
      b_p = jnp.zeros((INTER_PAD,), jnp.float32).at[:d_out].set(b)
    w_blocks.append(w_p)
    b_rows.append(b_p)

  b_rows.append(jnp.zeros((INTER_PAD,), jnp.float32))               # pad to 8 rows
  w_slab = jnp.concatenate(w_blocks, axis=0).astype(jnp.bfloat16)   # (1408, 128)
  b_slab = jnp.stack(b_rows, axis=0)                                # (8, 128) f32
  return w_slab, b_slab


def build_adjacency(edge_index, num_nodes):
  """Edge-count matrix (exactly representable small ints) + per-row 1/deg.
  counts @ x scaled by inv_deg == SAGEConv mean aggregation (duplicates counted,
  matching scatter-mean over the edge list)."""
  src, dst = edge_index[0], edge_index[1]
  counts = jnp.zeros((num_nodes, num_nodes), jnp.float32).at[dst, src].add(1.0)
  deg = jnp.sum(counts, axis=1, keepdims=True)
  inv_deg = 1.0 / jnp.maximum(deg, 1.0)
  return counts, inv_deg


# --------------------------------------------------------------------------
# Pure-JAX f32 reference (un-folded, un-fused) for validation
# --------------------------------------------------------------------------
def graphsage_reference(adj_norm, pos, convs, lins):
  x = pos
  for c in convs:
    agg = adj_norm @ x
    h = agg @ c['w_l'] + c['b_l'] + x @ c['w_r']
    h = (h - c['rmean']) * (c['gamma'] * jax.lax.rsqrt(c['rvar'] + BN_EPS)) + c['beta']
    x = jnp.maximum(h, 0.0)
  (w1, b1), (w2, b2), (w3, b3) = lins
  x = jnp.maximum(x @ w1 + b1, 0.0)
  x = x @ w2 + b2
  x = x @ w3 + b3
  return jax.nn.log_softmax(x, axis=-1)


if __name__ == "__main__":
  N = 64          # number of graph nodes
  E = 256         # number of directed edges
  INP_DIM = 3     # data.pos is 3-D coordinates
  INTER_DIM = 32
  OUP_DIM = 10
  # cls=True -> log_softmax head (baked into the kernel).

  key = jax.random.PRNGKey(0)
  key, k_pos, k_src, k_dst, k_param = jax.random.split(key, 5)

  pos = jax.random.normal(k_pos, (N, INP_DIM), jnp.float32)
  edge_index = jnp.stack([
      jax.random.randint(k_src, (E,), 0, N, dtype=jnp.int32),
      jax.random.randint(k_dst, (E,), 0, N, dtype=jnp.int32),
  ], axis=0)

  adj_counts, inv_deg = build_adjacency(edge_index, N)
  convs, lins = build_raw_params(k_param, INP_DIM, INTER_DIM, OUP_DIM)
  w_slab, b_slab = fold_and_pack(convs, lins, INTER_DIM, OUP_DIM)

  out = graphsage_forward(adj_counts, inv_deg, pos, w_slab, b_slab,
                          oup_dim=OUP_DIM)
  out = jax.block_until_ready(out)

  assert out.shape == (N, OUP_DIM)
  assert bool(jnp.all(jnp.isfinite(out)))
  # log_softmax rows should sum to ~1 in probability space.
  assert bool(jnp.allclose(jnp.sum(jnp.exp(out), axis=-1), 1.0, atol=1e-3))
  # Loose tolerance vs. the f32 reference: mean aggregation is now exact
  # (integer counts + f32 row scale); remaining error is bf16 quantization of
  # the BN-folded weights and per-layer activations.
  ref = graphsage_reference(adj_counts * inv_deg, pos, convs, lins)
  max_diff = float(jnp.max(jnp.abs(out - ref)))
  assert max_diff < 0.5, f"max |kernel - ref| = {max_diff}"
  print("KERNEL_OK")
</pallas_src>

<mosaic_0001>
module attributes {stable_mosaic.version = 11 : i64} {
  func.func @graphsage_kernel(%arg0: memref<128x128xbf16, #tpu.memory_space<vmem>>, %arg1: memref<128x1xf32, #tpu.memory_space<vmem>>, %arg2: memref<128x128xbf16, #tpu.memory_space<vmem>>, %arg3: memref<1408x128xbf16, #tpu.memory_space<vmem>>, %arg4: memref<8x128xf32, #tpu.memory_space<vmem>>, %arg5: memref<128x128xf32, #tpu.memory_space<vmem>>) attributes {dimension_semantics = [], scalar_prefetch = 0 : i64, scratch_operands = 0 : i64, tpu.core_type = #tpu.core_type<tc>} {
    %c0 = arith.constant 0 : index
    %c0_0 = arith.constant 0 : index
    %0 = vector.load %arg0[%c0, %c0_0] : memref<128x128xbf16, #tpu.memory_space<vmem>>, vector<128x128xbf16>
    %c0_1 = arith.constant 0 : index
    %c0_2 = arith.constant 0 : index
    %1 = vector.load %arg1[%c0_1, %c0_2] : memref<128x1xf32, #tpu.memory_space<vmem>>, vector<128x1xf32>
    %c0_3 = arith.constant 0 : index
    %c0_4 = arith.constant 0 : index
    %2 = vector.load %arg2[%c0_3, %c0_4] : memref<128x128xbf16, #tpu.memory_space<vmem>>, vector<128x128xbf16>
    %c0_5 = arith.constant 0 : index
    %c0_6 = arith.constant 0 : index
    %3 = vector.load %arg3[%c0_5, %c0_6] : memref<1408x128xbf16, #tpu.memory_space<vmem>>, vector<256x128xbf16>
    %c0_7 = arith.constant 0 : index
    %c0_8 = arith.constant 0 : index
    %4 = vector.load %arg4[%c0_7, %c0_8] : memref<8x128xf32, #tpu.memory_space<vmem>>, vector<1x128xf32>
    %cst = arith.constant dense<0.000000e+00> : vector<128x128xf32>
    %5 = tpu.matmul %0, %2, %cst {dimension_numbers = #tpu.dot_dimension_numbers<[1], [0], [0], [1], [0, 0, 1, 1], [], []>} : vector<128x128xbf16>, vector<128x128xbf16>, vector<128x128xf32> -> vector<128x128xf32>
    %6 = vector.broadcast %1 : vector<128x1xf32> to vector<128x128xf32>
    %7 = arith.mulf %5, %6 : vector<128x128xf32>
    %8 = arith.truncf %7 : vector<128x128xf32> to vector<128x128xbf16>
    %9 = tpu.concatenate %8, %2 in 1 : vector<128x128xbf16>, vector<128x128xbf16> -> vector<128x256xbf16>
    %cst_9 = arith.constant dense<0.000000e+00> : vector<128x128xf32>
    %10 = tpu.matmul %9, %3, %cst_9 {dimension_numbers = #tpu.dot_dimension_numbers<[1], [0], [0], [1], [0, 0, 1, 1], [], []>} : vector<128x256xbf16>, vector<256x128xbf16>, vector<128x128xf32> -> vector<128x128xf32>
    %11 = vector.broadcast %4 : vector<1x128xf32> to vector<128x128xf32>
    %12 = arith.addf %10, %11 : vector<128x128xf32>
    %cst_10 = arith.constant 0.000000e+00 : f32
    %13 = vector.broadcast %cst_10 : f32 to vector<128x128xf32>
    %14 = arith.maximumf %12, %13 : vector<128x128xf32>
    %15 = arith.truncf %14 : vector<128x128xf32> to vector<128x128xbf16>
    %c256 = arith.constant 256 : index
    %c0_11 = arith.constant 0 : index
    %16 = vector.load %arg3[%c256, %c0_11] : memref<1408x128xbf16, #tpu.memory_space<vmem>>, vector<256x128xbf16>
    %c1 = arith.constant 1 : index
    %c0_12 = arith.constant 0 : index
    %17 = vector.load %arg4[%c1, %c0_12] : memref<8x128xf32, #tpu.memory_space<vmem>>, vector<1x128xf32>
    %cst_13 = arith.constant dense<0.000000e+00> : vector<128x128xf32>
    %18 = tpu.matmul %0, %15, %cst_13 {dimension_numbers = #tpu.dot_dimension_numbers<[1], [0], [0], [1], [0, 0, 1, 1], [], []>} : vector<128x128xbf16>, vector<128x128xbf16>, vector<128x128xf32> -> vector<128x128xf32>
    %19 = vector.broadcast %1 : vector<128x1xf32> to vector<128x128xf32>
    %20 = arith.mulf %18, %19 : vector<128x128xf32>
    %21 = arith.truncf %20 : vector<128x128xf32> to vector<128x128xbf16>
    %22 = tpu.concatenate %21, %15 in 1 : vector<128x128xbf16>, vector<128x128xbf16> -> vector<128x256xbf16>
    %cst_14 = arith.constant dense<0.000000e+00> : vector<128x128xf32>
    %23 = tpu.matmul %22, %16, %cst_14 {dimension_numbers = #tpu.dot_dimension_numbers<[1], [0], [0], [1], [0, 0, 1, 1], [], []>} : vector<128x256xbf16>, vector<256x128xbf16>, vector<128x128xf32> -> vector<128x128xf32>
    %24 = vector.broadcast %17 : vector<1x128xf32> to vector<128x128xf32>
    %25 = arith.addf %23, %24 : vector<128x128xf32>
    %cst_15 = arith.constant 0.000000e+00 : f32
    %26 = vector.broadcast %cst_15 : f32 to vector<128x128xf32>
    %27 = arith.maximumf %25, %26 : vector<128x128xf32>
    %28 = arith.truncf %27 : vector<128x128xf32> to vector<128x128xbf16>
    %c512 = arith.constant 512 : index
    %c0_16 = arith.constant 0 : index
    %29 = vector.load %arg3[%c512, %c0_16] : memref<1408x128xbf16, #tpu.memory_space<vmem>>, vector<256x128xbf16>
    %c2 = arith.constant 2 : index
    %c0_17 = arith.constant 0 : index
    %30 = vector.load %arg4[%c2, %c0_17] : memref<8x128xf32, #tpu.memory_space<vmem>>, vector<1x128xf32>
    %cst_18 = arith.constant dense<0.000000e+00> : vector<128x128xf32>
    %31 = tpu.matmul %0, %28, %cst_18 {dimension_numbers = #tpu.dot_dimension_numbers<[1], [0], [0], [1], [0, 0, 1, 1], [], []>} : vector<128x128xbf16>, vector<128x128xbf16>, vector<128x128xf32> -> vector<128x128xf32>
    %32 = vector.broadcast %1 : vector<128x1xf32> to vector<128x128xf32>
    %33 = arith.mulf %31, %32 : vector<128x128xf32>
    %34 = arith.truncf %33 : vector<128x128xf32> to vector<128x128xbf16>
    %35 = tpu.concatenate %34, %28 in 1 : vector<128x128xbf16>, vector<128x128xbf16> -> vector<128x256xbf16>
    %cst_19 = arith.constant dense<0.000000e+00> : vector<128x128xf32>
    %36 = tpu.matmul %35, %29, %cst_19 {dimension_numbers = #tpu.dot_dimension_numbers<[1], [0], [0], [1], [0, 0, 1, 1], [], []>} : vector<128x256xbf16>, vector<256x128xbf16>, vector<128x128xf32> -> vector<128x128xf32>
    %37 = vector.broadcast %30 : vector<1x128xf32> to vector<128x128xf32>
    %38 = arith.addf %36, %37 : vector<128x128xf32>
    %cst_20 = arith.constant 0.000000e+00 : f32
    %39 = vector.broadcast %cst_20 : f32 to vector<128x128xf32>
    %40 = arith.maximumf %38, %39 : vector<128x128xf32>
    %41 = arith.truncf %40 : vector<128x128xf32> to vector<128x128xbf16>
    %c768 = arith.constant 768 : index
    %c0_21 = arith.constant 0 : index
    %42 = vector.load %arg3[%c768, %c0_21] : memref<1408x128xbf16, #tpu.memory_space<vmem>>, vector<256x128xbf16>
    %c3 = arith.constant 3 : index
    %c0_22 = arith.constant 0 : index
    %43 = vector.load %arg4[%c3, %c0_22] : memref<8x128xf32, #tpu.memory_space<vmem>>, vector<1x128xf32>
    %cst_23 = arith.constant dense<0.000000e+00> : vector<128x128xf32>
    %44 = tpu.matmul %0, %41, %cst_23 {dimension_numbers = #tpu.dot_dimension_numbers<[1], [0], [0], [1], [0, 0, 1, 1], [], []>} : vector<128x128xbf16>, vector<128x128xbf16>, vector<128x128xf32> -> vector<128x128xf32>
    %45 = vector.broadcast %1 : vector<128x1xf32> to vector<128x128xf32>
    %46 = arith.mulf %44, %45 : vector<128x128xf32>
    %47 = arith.truncf %46 : vector<128x128xf32> to vector<128x128xbf16>
    %48 = tpu.concatenate %47, %41 in 1 : vector<128x128xbf16>, vector<128x128xbf16> -> vector<128x256xbf16>
    %cst_24 = arith.constant dense<0.000000e+00> : vector<128x128xf32>
    %49 = tpu.matmul %48, %42, %cst_24 {dimension_numbers = #tpu.dot_dimension_numbers<[1], [0], [0], [1], [0, 0, 1, 1], [], []>} : vector<128x256xbf16>, vector<256x128xbf16>, vector<128x128xf32> -> vector<128x128xf32>
    %50 = vector.broadcast %43 : vector<1x128xf32> to vector<128x128xf32>
    %51 = arith.addf %49, %50 : vector<128x128xf32>
    %cst_25 = arith.constant 0.000000e+00 : f32
    %52 = vector.broadcast %cst_25 : f32 to vector<128x128xf32>
    %53 = arith.maximumf %51, %52 : vector<128x128xf32>
    %54 = arith.truncf %53 : vector<128x128xf32> to vector<128x128xbf16>
    %c1024 = arith.constant 1024 : index
    %c0_26 = arith.constant 0 : index
    %55 = vector.load %arg3[%c1024, %c0_26] : memref<1408x128xbf16, #tpu.memory_space<vmem>>, vector<128x128xbf16>
    %c1152 = arith.constant 1152 : index
    %c0_27 = arith.constant 0 : index
    %56 = vector.load %arg3[%c1152, %c0_27] : memref<1408x128xbf16, #tpu.memory_space<vmem>>, vector<128x128xbf16>
    %c1280 = arith.constant 1280 : index
    %c0_28 = arith.constant 0 : index
    %57 = vector.load %arg3[%c1280, %c0_28] : memref<1408x128xbf16, #tpu.memory_space<vmem>>, vector<128x128xbf16>
    %c4 = arith.constant 4 : index
    %c0_29 = arith.constant 0 : index
    %58 = vector.load %arg4[%c4, %c0_29] : memref<8x128xf32, #tpu.memory_space<vmem>>, vector<1x128xf32>
    %c5 = arith.constant 5 : index
    %c0_30 = arith.constant 0 : index
    %59 = vector.load %arg4[%c5, %c0_30] : memref<8x128xf32, #tpu.memory_space<vmem>>, vector<1x128xf32>
    %c6 = arith.constant 6 : index
    %c0_31 = arith.constant 0 : index
    %60 = vector.load %arg4[%c6, %c0_31] : memref<8x128xf32, #tpu.memory_space<vmem>>, vector<1x128xf32>
    %cst_32 = arith.constant dense<0.000000e+00> : vector<128x128xf32>
    %61 = tpu.matmul %54, %55, %cst_32 {dimension_numbers = #tpu.dot_dimension_numbers<[1], [0], [0], [1], [0, 0, 1, 1], [], []>} : vector<128x128xbf16>, vector<128x128xbf16>, vector<128x128xf32> -> vector<128x128xf32>
    %62 = vector.broadcast %58 : vector<1x128xf32> to vector<128x128xf32>
    %63 = arith.addf %61, %62 : vector<128x128xf32>
    %cst_33 = arith.constant 0.000000e+00 : f32
    %64 = vector.broadcast %cst_33 : f32 to vector<128x128xf32>
    %65 = arith.maximumf %63, %64 : vector<128x128xf32>
    %66 = arith.truncf %65 : vector<128x128xf32> to vector<128x128xbf16>
    %cst_34 = arith.constant dense<0.000000e+00> : vector<128x128xf32>
    %67 = tpu.matmul %66, %56, %cst_34 {dimension_numbers = #tpu.dot_dimension_numbers<[1], [0], [0], [1], [0, 0, 1, 1], [], []>} : vector<128x128xbf16>, vector<128x128xbf16>, vector<128x128xf32> -> vector<128x128xf32>
    %68 = vector.broadcast %59 : vector<1x128xf32> to vector<128x128xf32>
    %69 = arith.addf %67, %68 : vector<128x128xf32>
    %70 = arith.truncf %69 : vector<128x128xf32> to vector<128x128xbf16>
    %cst_35 = arith.constant dense<0.000000e+00> : vector<128x128xf32>
    %71 = tpu.matmul %70, %57, %cst_35 {dimension_numbers = #tpu.dot_dimension_numbers<[1], [0], [0], [1], [0, 0, 1, 1], [], []>} : vector<128x128xbf16>, vector<128x128xbf16>, vector<128x128xf32> -> vector<128x128xf32>
    %72 = vector.broadcast %60 : vector<1x128xf32> to vector<128x128xf32>
    %73 = arith.addf %71, %72 : vector<128x128xf32>
    %cst_36 = arith.constant dense<0xFF800000> : vector<128xf32>
    %74 = vector.multi_reduction <maximumf>, %73, %cst_36 [1] : vector<128x128xf32> to vector<128xf32>
    %75 = vector.shape_cast %74 : vector<128xf32> to vector<128x1xf32>
    %76 = vector.broadcast %75 : vector<128x1xf32> to vector<128x128xf32>
    %77 = arith.subf %73, %76 : vector<128x128xf32>
    %78 = math.exp %77 : vector<128x128xf32>
    %cst_37 = arith.constant dense<0.000000e+00> : vector<128xf32>
    %79 = vector.multi_reduction <add>, %78, %cst_37 [1] : vector<128x128xf32> to vector<128xf32>
    %80 = vector.shape_cast %79 : vector<128xf32> to vector<128x1xf32>
    %81 = math.log %80 : vector<128x1xf32>
    %82 = vector.broadcast %81 : vector<128x1xf32> to vector<128x128xf32>
    %83 = arith.subf %77, %82 : vector<128x128xf32>
    %c0_38 = arith.constant 0 : index
    %c0_39 = arith.constant 0 : index
    %84 = vector.load %arg5[%c0_38, %c0_39] : memref<128x128xf32, #tpu.memory_space<vmem>>, vector<128x128xf32>
    tpu.vector_store %arg5[%c0_38, %c0_39], %83 {strides = array<i32>} : memref<128x128xf32, #tpu.memory_space<vmem>>, vector<128x128xf32>,
    return
  }
}

</mosaic_0001>

<llo_original>
// kernel: graphsage_forward.1
$region0: #{graphsage_forward.1}
  #allocation0 [shape = 'u32[]', space=smem, size = 0x4, offset = 0x4, fixed_abs, tag = 'smem constant byte address 0x4 - core index']
  #allocation1 [shape = 'u32[144,128]{1,0:T(1,128)}', space=vmem, size = 0x12000, scoped, tag = 'internal scratch']
  %s0 = inlined_call_operand.vmem [shape: bf16[128,128], index: 0, kind: input, shape index: {}]
  %s1 = inlined_call_operand.vmem [shape: f32[128,1], index: 1, kind: input, shape index: {}]
  %s2 = inlined_call_operand.vmem [shape: bf16[128,128], index: 2, kind: input, shape index: {}]
  %s3 = inlined_call_operand.hbm [shape: bf16[1408,128], index: 3, kind: input, shape index: {}]
  %s4 = inlined_call_operand.vmem [shape: f32[8,128], index: 4, kind: input, shape index: {}]
  %s5 = inlined_call_operand.vmem [shape: f32[128,128], index: 5, kind: output, shape index: {}]
  %s6 = sld [smem:[#allocation0]]
  $region34: #{graphsage_forward.1} parent=0
    _
  %s8 = ssub.s32 1, %s6
  %s9 = scalar_select 0, %s8, %s6
  $region1: #{graphsage_forward.1} parent=0
    #allocation2 [shape = 'u8[360448]{0}', space=vmem, size = 0x58000, scoped, tag = 'input window, operand 3, single buffered']
    #allocation3 [shape = 's32[1]{0}', space=sflag, size = 0x4, scoped, tag = 'scoped memory for graphsage_forward.1']
    %10 = vsyncpa [#allocation3], 0
    // Predicated region
    $region2: #{graphsage_forward.1} parent=1 // pred_check
      _
    $region3: #{graphsage_forward.1} parent=1 // pred_check_branch
      %12 = sbr.rel (0) target = $region5
    $region4: #{graphsage_forward.1} parent=1 // pred_region
      _
    $region5: #{graphsage_forward.1} parent=1 // pred_fallthru
      _
    // Predicated region
    $region6: #{graphsage_forward.1} parent=1 // pred_check
      _
    $region7: #{graphsage_forward.1} parent=1 // pred_check_branch
      %14 = sbr.rel (0) target = $region9
    $region8: #{graphsage_forward.1} parent=1 // pred_region
      _
    $region9: #{graphsage_forward.1} parent=1 // pred_fallthru
      _
    // Predicated region
    $region10: #{graphsage_forward.1} parent=1 // pred_check
      _
    $region11: #{graphsage_forward.1} parent=1 // pred_check_branch
      %16 = sbr.rel (0) target = $region13
    $region12: #{graphsage_forward.1} parent=1 // pred_region
      _
    $region13: #{graphsage_forward.1} parent=1 // pred_fallthru
      _
    // Predicated region
    $region14: #{graphsage_forward.1} parent=1 // pred_check
      _
    $region15: #{graphsage_forward.1} parent=1 // pred_check_branch
      %18 = sbr.rel (0) target = $region17
    $region16: #{graphsage_forward.1} parent=1 // pred_region
      %s20 = ssub.s32 11264, 11264
      %21 = vsyncadd [#allocation3], %s20
      %s22 = sshll.u32 [#allocation2], 4
      %s23 = int_to_ptr.vmem [resolvable:$true] %s22
      %28 = dma.hbm_to_vmem [thread:$0]  %s3, 11264, %s23, [#allocation3], 64, 64, 4
    $region17: #{graphsage_forward.1} parent=1 // pred_fallthru
      _
    // Predicated region
    $region18: #{graphsage_forward.1} parent=1 // pred_check
      _
    $region19: #{graphsage_forward.1} parent=1 // pred_check_branch
      %30 = sbr.rel (0) target = $region21
    $region20: #{graphsage_forward.1} parent=1 // pred_region
      _
    $region21: #{graphsage_forward.1} parent=1 // pred_fallthru
      _
    // Predicated region
    $region22: #{graphsage_forward.1} parent=1 // pred_check
      _
    $region23: #{graphsage_forward.1} parent=1 // pred_check_branch
      %32 = sbr.rel (0) target = $region25
    $region24: #{graphsage_forward.1} parent=1 // pred_region
      %33 = dma.done [#allocation3], 11264
    $region25: #{graphsage_forward.1} parent=1 // pred_fallthru
      _
    %v35 = vld [vmem:[%s0] sm:$0xf]
    %v36 = vld [vmem:[%s0 + $0x4] sm:$0xf]
    %v37 = vld [vmem:[%s0 + $0x8] sm:$0xf]
    %v38 = vld [vmem:[%s0 + $0xc] sm:$0xf]
    %v39 = vld [vmem:[%s0 + $0x10] sm:$0xf]
    %v40 = vld [vmem:[%s0 + $0x14] sm:$0xf]
    %v41 = vld [vmem:[%s0 + $0x18] sm:$0xf]
    %v42 = vld [vmem:[%s0 + $0x1c] sm:$0xf]
    %v43 = vld [vmem:[%s0 + $0x20] sm:$0xf]
    %v44 = vld [vmem:[%s0 + $0x24] sm:$0xf]
    %v45 = vld [vmem:[%s0 + $0x28] sm:$0xf]
    %v46 = vld [vmem:[%s0 + $0x2c] sm:$0xf]
    %v47 = vld [vmem:[%s0 + $0x30] sm:$0xf]
    %v48 = vld [vmem:[%s0 + $0x34] sm:$0xf]
    %v49 = vld [vmem:[%s0 + $0x38] sm:$0xf]
    %v50 = vld [vmem:[%s0 + $0x3c] sm:$0xf]
    %v51 = vld [vmem:[%s1] sm:$0xff]
    %v52 = vld [vmem:[%s1 + $0x8] sm:$0xff]
    %v53 = vld [vmem:[%s1 + $0x10] sm:$0xff]
    %v54 = vld [vmem:[%s1 + $0x18] sm:$0xff]
    %v55 = vld [vmem:[%s1 + $0x20] sm:$0xff]
    %v56 = vld [vmem:[%s1 + $0x28] sm:$0xff]
    %v57 = vld [vmem:[%s1 + $0x30] sm:$0xff]
    %v58 = vld [vmem:[%s1 + $0x38] sm:$0xff]
    %v59 = vld [vmem:[%s1 + $0x40] sm:$0xff]
    %v60 = vld [vmem:[%s1 + $0x48] sm:$0xff]
    %v61 = vld [vmem:[%s1 + $0x50] sm:$0xff]
    %v62 = vld [vmem:[%s1 + $0x58] sm:$0xff]
    %v63 = vld [vmem:[%s1 + $0x60] sm:$0xff]
    %v64 = vld [vmem:[%s1 + $0x68] sm:$0xff]
    %v65 = vld [vmem:[%s1 + $0x70] sm:$0xff]
    %v66 = vld [vmem:[%s1 + $0x78] sm:$0xff]
    %v67 = vld [vmem:[%s2] sm:$0xf]
    %v68 = vld [vmem:[%s2 + $0x4] sm:$0xf]
    %v69 = vld [vmem:[%s2 + $0x8] sm:$0xf]
    %v70 = vld [vmem:[%s2 + $0xc] sm:$0xf]
    %v71 = vld [vmem:[%s2 + $0x10] sm:$0xf]
    %v72 = vld [vmem:[%s2 + $0x14] sm:$0xf]
    %v73 = vld [vmem:[%s2 + $0x18] sm:$0xf]
    %v74 = vld [vmem:[%s2 + $0x1c] sm:$0xf]
    %v75 = vld [vmem:[%s2 + $0x20] sm:$0xf]
    %v76 = vld [vmem:[%s2 + $0x24] sm:$0xf]
    %v77 = vld [vmem:[%s2 + $0x28] sm:$0xf]
    %v78 = vld [vmem:[%s2 + $0x2c] sm:$0xf]
    %v79 = vld [vmem:[%s2 + $0x30] sm:$0xf]
    %v80 = vld [vmem:[%s2 + $0x34] sm:$0xf]
    %v81 = vld [vmem:[%s2 + $0x38] sm:$0xf]
    %v82 = vld [vmem:[%s2 + $0x3c] sm:$0xf]
    %v83 = vld [vmem:[#allocation2] sm:$0xf]
    %v84 = vld [vmem:[#allocation2 + $0x4] sm:$0xf]
    %v85 = vld [vmem:[#allocation2 + $0x8] sm:$0xf]
    %v86 = vld [vmem:[#allocation2 + $0xc] sm:$0xf]
    %v87 = vld [vmem:[#allocation2 + $0x10] sm:$0xf]
    %v88 = vld [vmem:[#allocation2 + $0x14] sm:$0xf]
    %v89 = vld [vmem:[#allocation2 + $0x18] sm:$0xf]
    %v90 = vld [vmem:[#allocation2 + $0x1c] sm:$0xf]
    %v91 = vld [vmem:[#allocation2 + $0x20] sm:$0xf]
    %v92 = vld [vmem:[#allocation2 + $0x24] sm:$0xf]
    %v93 = vld [vmem:[#allocation2 + $0x28] sm:$0xf]
    %v94 = vld [vmem:[#allocation2 + $0x2c] sm:$0xf]
    %v95 = vld [vmem:[#allocation2 + $0x30] sm:$0xf]
    %v96 = vld [vmem:[#allocation2 + $0x34] sm:$0xf]
    %v97 = vld [vmem:[#allocation2 + $0x38] sm:$0xf]
    %v98 = vld [vmem:[#allocation2 + $0x3c] sm:$0xf]
    %v99 = vld [vmem:[#allocation2 + $0x40] sm:$0xf]
    %v100 = vld [vmem:[#allocation2 + $0x44] sm:$0xf]
    %v101 = vld [vmem:[#allocation2 + $0x48] sm:$0xf]
    %v102 = vld [vmem:[#allocation2 + $0x4c] sm:$0xf]
    %v103 = vld [vmem:[#allocation2 + $0x50] sm:$0xf]
    %v104 = vld [vmem:[#allocation2 + $0x54] sm:$0xf]
    %v105 = vld [vmem:[#allocation2 + $0x58] sm:$0xf]
    %v106 = vld [vmem:[#allocation2 + $0x5c] sm:$0xf]
    %v107 = vld [vmem:[#allocation2 + $0x60] sm:$0xf]
    %v108 = vld [vmem:[#allocation2 + $0x64] sm:$0xf]
    %v109 = vld [vmem:[#allocation2 + $0x68] sm:$0xf]
    %v110 = vld [vmem:[#allocation2 + $0x6c] sm:$0xf]
    %v111 = vld [vmem:[#allocation2 + $0x70] sm:$0xf]
    %v112 = vld [vmem:[#allocation2 + $0x74] sm:$0xf]
    %v113 = vld [vmem:[#allocation2 + $0x78] sm:$0xf]
    %v114 = vld [vmem:[#allocation2 + $0x7c] sm:$0xf]
    %v115 = vld [vmem:[%s4] sm:$0x1]
    %v132 = vunpack.c.l.b16 %v35
    %v133 = vunpack.c.l.b16 %v36
    %v134 = vunpack.c.l.b16 %v37
    %v135 = vunpack.c.l.b16 %v38
    %v136 = vunpack.c.l.b16 %v39
    %v137 = vunpack.c.l.b16 %v40
    %v138 = vunpack.c.l.b16 %v41
    %v139 = vunpack.c.l.b16 %v42
    %v140 = vunpack.c.l.b16 %v43
    %v141 = vunpack.c.l.b16 %v44
    %v142 = vunpack.c.l.b16 %v45
    %v143 = vunpack.c.l.b16 %v46
    %v144 = vunpack.c.l.b16 %v47
    %v145 = vunpack.c.l.b16 %v48
    %v146 = vunpack.c.l.b16 %v49
    %v147 = vunpack.c.l.b16 %v50
    %v148 = vpack.c.b16 %v133, %v132
    %v149 = vpack.c.b16 %v135, %v134
    %v150 = vpack.c.b16 %v137, %v136
    %v151 = vpack.c.b16 %v139, %v138
    %v152 = vpack.c.b16 %v141, %v140
    %v153 = vpack.c.b16 %v143, %v142
    %v154 = vpack.c.b16 %v145, %v144
    %v155 = vpack.c.b16 %v147, %v146
    %v180 = vunpack.c.l.b16 %v67
    %v181 = vunpack.c.l.b16 %v68
    %v182 = vunpack.c.l.b16 %v69
    %v183 = vunpack.c.l.b16 %v70
    %v184 = vunpack.c.l.b16 %v71
    %v185 = vunpack.c.l.b16 %v72
    %v186 = vunpack.c.l.b16 %v73
    %v187 = vunpack.c.l.b16 %v74
    %v188 = vunpack.c.l.b16 %v75
    %v189 = vunpack.c.l.b16 %v76
    %v190 = vunpack.c.l.b16 %v77
    %v191 = vunpack.c.l.b16 %v78
    %v192 = vunpack.c.l.b16 %v79
    %v193 = vunpack.c.l.b16 %v80
    %v194 = vunpack.c.l.b16 %v81
    %v195 = vunpack.c.l.b16 %v82
    %v196 = vpack.c.b16 %v181, %v180
    %v197 = vpack.c.b16 %v183, %v182
    %v198 = vpack.c.b16 %v185, %v184
    %v199 = vpack.c.b16 %v187, %v186
    %v200 = vpack.c.b16 %v189, %v188
    %v201 = vpack.c.b16 %v191, %v190
    %v202 = vpack.c.b16 %v193, %v192
    %v203 = vpack.c.b16 %v195, %v194
    %212 = vmatprep.subr.bf16.mxu0 0
    %213 = vmatpush1.bf16.msra.mxu0 %v203
    %214 = vmatprep.subr.bf16.mxu0 0
    %215 = vmatpush1.bf16.msra.mxu0 %v202
    %216 = vmatprep.subr.bf16.mxu0 0
    %217 = vmatpush1.bf16.msra.mxu0 %v201
    %218 = vmatprep.subr.bf16.mxu0 0
    %219 = vmatpush1.bf16.msra.mxu0 %v200
    %220 = vmatprep.subr.bf16.mxu0 0
    %221 = vmatpush1.bf16.msra.mxu0 %v199
    %222 = vmatprep.subr.bf16.mxu0 0
    %223 = vmatpush1.bf16.msra.mxu0 %v198
    %224 = vmatprep.subr.bf16.mxu0 0
    %225 = vmatpush1.bf16.msra.mxu0 %v197
    %226 = vmatprep.subr.bf16.mxu0 0
    %227 = vmatpush1.bf16.msra.mxu0 %v196
    %228 = vmatprep.subr.bf16.mxu0 0
    %229 = vmatpush2.bf16.msra.mxu0 0
    %230 = vmatprep.subr.bf16.mxu0 0
    %231 = vmatpush2.bf16.msra.mxu0 0
    %232 = vmatprep.subr.bf16.mxu0 0
    %233 = vmatpush2.bf16.msra.mxu0 0
    %234 = vmatprep.subr.bf16.mxu0 0
    %235 = vmatpush2.bf16.msra.mxu0 0
    %236 = vmatprep.subr.bf16.mxu0 0
    %237 = vmatpush2.bf16.msra.mxu0 0
    %238 = vmatprep.subr.bf16.mxu0 0
    %239 = vmatpush2.bf16.msra.mxu0 0
    %240 = vmatprep.subr.bf16.mxu0 0
    %241 = vmatpush2.bf16.msra.mxu0 0
    %242 = vmatprep.subr.bf16.mxu0 0
    %243 = vmatpush2.bf16.msra.mxu0 0
    %244 = vmatprep.mubr.bf16.mxu0 0
    %245 = vmatmul.mubr.bf16.gmra.mxu0 %v148
    %v246 = vpop.f32.mrf.mxu0
    %v247 = vadd.f32 0.0, %v246
    %v248 = vpop.f32.mrf.mxu0
    %v249 = vpop.f32.mrf.mxu0
    %v250 = vadd.f32 0.0, %v249
    %v251 = vpop.f32.mrf.mxu0
    %252 = vmatprep.mubr.bf16.mxu0 0
    %253 = vmatmul.mubr.bf16.gmra.mxu0 %v149
    %v254 = vpop.f32.mrf.mxu0
    %v255 = vadd.f32 0.0, %v254
    %v256 = vpop.f32.mrf.mxu0
    %v257 = vpop.f32.mrf.mxu0
    %v258 = vadd.f32 0.0, %v257
    %v259 = vpop.f32.mrf.mxu0
    %260 = vmatprep.mubr.bf16.mxu0 0
    %261 = vmatmul.mubr.bf16.gmra.mxu0 %v150
    %v262 = vpop.f32.mrf.mxu0
    %v263 = vadd.f32 0.0, %v262
    %v264 = vpop.f32.mrf.mxu0
    %v265 = vpop.f32.mrf.mxu0
    %v266 = vadd.f32 0.0, %v265
    %v267 = vpop.f32.mrf.mxu0
    %268 = vmatprep.mubr.bf16.mxu0 0
    %269 = vmatmul.mubr.bf16.gmra.mxu0 %v151
    %v270 = vpop.f32.mrf.mxu0
    %v271 = vadd.f32 0.0, %v270
    %v272 = vpop.f32.mrf.mxu0
    %v273 = vpop.f32.mrf.mxu0
    %v274 = vadd.f32 0.0, %v273
    %v275 = vpop.f32.mrf.mxu0
    %276 = vmatprep.mubr.bf16.mxu0 0
    %277 = vmatmul.mubr.bf16.gmra.mxu0 %v152
    %v278 = vpop.f32.mrf.mxu0
    %v279 = vadd.f32 0.0, %v278
    %v280 = vpop.f32.mrf.mxu0
    %v281 = vpop.f32.mrf.mxu0
    %v282 = vadd.f32 0.0, %v281
    %v283 = vpop.f32.mrf.mxu0
    %284 = vmatprep.mubr.bf16.mxu0 0
    %285 = vmatmul.mubr.bf16.gmra.mxu0 %v153
    %v286 = vpop.f32.mrf.mxu0
    %v287 = vadd.f32 0.0, %v286
    %v288 = vpop.f32.mrf.mxu0
    %v289 = vpop.f32.mrf.mxu0
    %v290 = vadd.f32 0.0, %v289
    %v291 = vpop.f32.mrf.mxu0
    %292 = vmatprep.mubr.bf16.mxu0 0
    %293 = vmatmul.mubr.bf16.gmra.mxu0 %v154
    %v294 = vpop.f32.mrf.mxu0
    %v295 = vadd.f32 0.0, %v294
    %v296 = vpop.f32.mrf.mxu0
    %v297 = vpop.f32.mrf.mxu0
    %v298 = vadd.f32 0.0, %v297
    %v299 = vpop.f32.mrf.mxu0
    %300 = vmatprep.mubr.bf16.mxu0 0
    %301 = vmatmul.mubr.bf16.gmra.mxu0 %v155
    %v302 = vpop.f32.mrf.mxu0
    %v303 = vadd.f32 0.0, %v302
    %v304 = vpop.f32.mrf.mxu0
    %v305 = vpop.f32.mrf.mxu0
    %v306 = vadd.f32 0.0, %v305
    %v307 = vpop.f32.mrf.mxu0
    %308 = vdwg.mxu0
    %310 = vset.pattern.permute.xlu0 0
    %311 = vperm.xlu0 %310, %v51
    %v312 = vpop.permute.xlu0 %311
    %315 = vset.pattern.permute.xlu0 0
    %316 = vperm.xlu0 %315, %v52
    %v317 = vpop.permute.xlu0 %316
    %320 = vset.pattern.permute.xlu0 0
    %321 = vperm.xlu0 %320, %v53
    %v322 = vpop.permute.xlu0 %321
    %325 = vset.pattern.permute.xlu0 0
    %326 = vperm.xlu0 %325, %v54
    %v327 = vpop.permute.xlu0 %326
    %330 = vset.pattern.permute.xlu0 0
    %331 = vperm.xlu0 %330, %v55
    %v332 = vpop.permute.xlu0 %331
    %335 = vset.pattern.permute.xlu0 0
    %336 = vperm.xlu0 %335, %v56
    %v337 = vpop.permute.xlu0 %336
    %340 = vset.pattern.permute.xlu0 0
    %341 = vperm.xlu0 %340, %v57
    %v342 = vpop.permute.xlu0 %341
    %345 = vset.pattern.permute.xlu0 0
    %346 = vperm.xlu0 %345, %v58
    %v347 = vpop.permute.xlu0 %346
    %350 = vset.pattern.permute.xlu0 0
    %351 = vperm.xlu0 %350, %v59
    %v352 = vpop.permute.xlu0 %351
    %355 = vset.pattern.permute.xlu0 0
    %356 = vperm.xlu0 %355, %v60
    %v357 = vpop.permute.xlu0 %356
    %360 = vset.pattern.permute.xlu0 0
    %361 = vperm.xlu0 %360, %v61
    %v362 = vpop.permute.xlu0 %361
    %365 = vset.pattern.permute.xlu0 0
    %366 = vperm.xlu0 %365, %v62
    %v367 = vpop.permute.xlu0 %366
    %370 = vset.pattern.permute.xlu0 0
    %371 = vperm.xlu0 %370, %v63
    %v372 = vpop.permute.xlu0 %371
    %375 = vset.pattern.permute.xlu0 0
    %376 = vperm.xlu0 %375, %v64
    %v377 = vpop.permute.xlu0 %376
    %380 = vset.pattern.permute.xlu0 0
    %381 = vperm.xlu0 %380, %v65
    %v382 = vpop.permute.xlu0 %381
    %385 = vset.pattern.permute.xlu0 0
    %386 = vperm.xlu0 %385, %v66
    %v387 = vpop.permute.xlu0 %386
    %v389 = vmul.f32 %v247, %v312
    %v390 = vmul.f32 %v250, %v317
    %v391 = vmul.f32 %v255, %v322
    %v392 = vmul.f32 %v258, %v327
    %v393 = vmul.f32 %v263, %v332
    %v394 = vmul.f32 %v266, %v337
    %v395 = vmul.f32 %v271, %v342
    %v396 = vmul.f32 %v274, %v347
    %v397 = vmul.f32 %v279, %v352
    %v398 = vmul.f32 %v282, %v357
    %v399 = vmul.f32 %v287, %v362
    %v400 = vmul.f32 %v290, %v367
    %v401 = vmul.f32 %v295, %v372
    %v402 = vmul.f32 %v298, %v377
    %v403 = vmul.f32 %v303, %v382
    %v404 = vmul.f32 %v306, %v387
    %v405 = vpack.c.bf16 %v390, %v389
    %v406 = vpack.c.bf16 %v392, %v391
    %v407 = vpack.c.bf16 %v394, %v393
    %v408 = vpack.c.bf16 %v396, %v395
    %v409 = vpack.c.bf16 %v398, %v397
    %v410 = vpack.c.bf16 %v400, %v399
    %v411 = vpack.c.bf16 %v402, %v401
    %v412 = vpack.c.bf16 %v404, %v403
    %v413 = vlaneseq
    %v414 = vshrl.u32 %v413, 7
    %v415 = vsub.s32 0, %v414
    %v416 = vrot.slane %v115, %v415
    %v449 = vunpack.c.l.b16 %v83
    %v450 = vunpack.c.l.b16 %v84
    %v451 = vunpack.c.l.b16 %v85
    %v452 = vunpack.c.l.b16 %v86
    %v453 = vunpack.c.l.b16 %v87
    %v454 = vunpack.c.l.b16 %v88
    %v455 = vunpack.c.l.b16 %v89
    %v456 = vunpack.c.l.b16 %v90
    %v457 = vunpack.c.l.b16 %v91
    %v458 = vunpack.c.l.b16 %v92
    %v459 = vunpack.c.l.b16 %v93
    %v460 = vunpack.c.l.b16 %v94
    %v461 = vunpack.c.l.b16 %v95
    %v462 = vunpack.c.l.b16 %v96
    %v463 = vunpack.c.l.b16 %v97
    %v464 = vunpack.c.l.b16 %v98
    %v465 = vunpack.c.l.b16 %v99
    %v466 = vunpack.c.l.b16 %v100
    %v467 = vunpack.c.l.b16 %v101
    %v468 = vunpack.c.l.b16 %v102
    %v469 = vunpack.c.l.b16 %v103
    %v470 = vunpack.c.l.b16 %v104
    %v471 = vunpack.c.l.b16 %v105
    %v472 = vunpack.c.l.b16 %v106
    %v473 = vunpack.c.l.b16 %v107
    %v474 = vunpack.c.l.b16 %v108
    %v475 = vunpack.c.l.b16 %v109
    %v476 = vunpack.c.l.b16 %v110
    %v477 = vunpack.c.l.b16 %v111
    %v478 = vunpack.c.l.b16 %v112
    %v479 = vunpack.c.l.b16 %v113
    %v480 = vunpack.c.l.b16 %v114
    %v481 = vpack.c.b16 %v450, %v449
    %v482 = vpack.c.b16 %v452, %v451
    %v483 = vpack.c.b16 %v454, %v453
    %v484 = vpack.c.b16 %v456, %v455
    %v485 = vpack.c.b16 %v458, %v457
    %v486 = vpack.c.b16 %v460, %v459
    %v487 = vpack.c.b16 %v462, %v461
    %v488 = vpack.c.b16 %v464, %v463
    %v489 = vpack.c.b16 %v466, %v465
    %v490 = vpack.c.b16 %v468, %v467
    %v491 = vpack.c.b16 %v470, %v469
    %v492 = vpack.c.b16 %v472, %v471
    %v493 = vpack.c.b16 %v474, %v473
    %v494 = vpack.c.b16 %v476, %v475
    %v495 = vpack.c.b16 %v478, %v477
    %v496 = vpack.c.b16 %v480, %v479
    %513 = vmatprep.subr.bf16.mxu0 0
    %514 = vmatpush1.bf16.msra.mxu0 %v488
    %515 = vmatprep.subr.bf16.mxu0 0
    %516 = vmatpush1.bf16.msra.mxu0 %v487
    %517 = vmatprep.subr.bf16.mxu0 0
    %518 = vmatpush1.bf16.msra.mxu0 %v486
    %519 = vmatprep.subr.bf16.mxu0 0
    %520 = vmatpush1.bf16.msra.mxu0 %v485
    %521 = vmatprep.subr.bf16.mxu0 0
    %522 = vmatpush1.bf16.msra.mxu0 %v484
    %523 = vmatprep.subr.bf16.mxu0 0
    %524 = vmatpush1.bf16.msra.mxu0 %v483
    %525 = vmatprep.subr.bf16.mxu0 0
    %526 = vmatpush1.bf16.msra.mxu0 %v482
    %527 = vmatprep.subr.bf16.mxu0 0
    %528 = vmatpush1.bf16.msra.mxu0 %v481
    %529 = vmatprep.subr.bf16.mxu0 0
    %530 = vmatpush2.bf16.msra.mxu0 %v496
    %531 = vmatprep.subr.bf16.mxu0 0
    %532 = vmatpush2.bf16.msra.mxu0 %v495
    %533 = vmatprep.subr.bf16.mxu0 0
    %534 = vmatpush2.bf16.msra.mxu0 %v494
    %535 = vmatprep.subr.bf16.mxu0 0
    %536 = vmatpush2.bf16.msra.mxu0 %v493
    %537 = vmatprep.subr.bf16.mxu0 0
    %538 = vmatpush2.bf16.msra.mxu0 %v492
    %539 = vmatprep.subr.bf16.mxu0 0
    %540 = vmatpush2.bf16.msra.mxu0 %v491
    %541 = vmatprep.subr.bf16.mxu0 0
    %542 = vmatpush2.bf16.msra.mxu0 %v490
    %543 = vmatprep.subr.bf16.mxu0 0
    %544 = vmatpush2.bf16.msra.mxu0 %v489
    %545 = vmatprep.mubr.bf16.mxu0 %v196
    %546 = vmatmul.mubr.bf16.gmra.mxu0 %v405
    %v547 = vpop.f32.mrf.mxu0
    %v548 = vadd.f32 %v416, %v547
    %v549 = vpop.f32.mrf.mxu0
    %v550 = vpop.f32.mrf.mxu0
    %v551 = vadd.f32 %v416, %v550
    %v552 = vpop.f32.mrf.mxu0
    %553 = vmatprep.mubr.bf16.mxu0 %v197
    %554 = vmatmul.mubr.bf16.gmra.mxu0 %v406
    %v555 = vpop.f32.mrf.mxu0
    %v556 = vadd.f32 %v416, %v555
    %v557 = vpop.f32.mrf.mxu0
    %v558 = vpop.f32.mrf.mxu0
    %v559 = vadd.f32 %v416, %v558
    %v560 = vpop.f32.mrf.mxu0
    %561 = vmatprep.mubr.bf16.mxu0 %v198
    %562 = vmatmul.mubr.bf16.gmra.mxu0 %v407
    %v563 = vpop.f32.mrf.mxu0
    %v564 = vadd.f32 %v416, %v563
    %v565 = vpop.f32.mrf.mxu0
    %v566 = vpop.f32.mrf.mxu0
    %v567 = vadd.f32 %v416, %v566
    %v568 = vpop.f32.mrf.mxu0
    %569 = vmatprep.mubr.bf16.mxu0 %v199
    %570 = vmatmul.mubr.bf16.gmra.mxu0 %v408
    %v571 = vpop.f32.mrf.mxu0
    %v572 = vadd.f32 %v416, %v571
    %v573 = vpop.f32.mrf.mxu0
    %v574 = vpop.f32.mrf.mxu0
    %v575 = vadd.f32 %v416, %v574
    %v576 = vpop.f32.mrf.mxu0
    %577 = vmatprep.mubr.bf16.mxu0 %v200
    %578 = vmatmul.mubr.bf16.gmra.mxu0 %v409
    %v579 = vpop.f32.mrf.mxu0
    %v580 = vadd.f32 %v416, %v579
    %v581 = vpop.f32.mrf.mxu0
    %v582 = vpop.f32.mrf.mxu0
    %v583 = vadd.f32 %v416, %v582
    %v584 = vpop.f32.mrf.mxu0
    %585 = vmatprep.mubr.bf16.mxu0 %v201
    %586 = vmatmul.mubr.bf16.gmra.mxu0 %v410
    %v587 = vpop.f32.mrf.mxu0
    %v588 = vadd.f32 %v416, %v587
    %v589 = vpop.f32.mrf.mxu0
    %v590 = vpop.f32.mrf.mxu0
    %v591 = vadd.f32 %v416, %v590
    %v592 = vpop.f32.mrf.mxu0
    %593 = vmatprep.mubr.bf16.mxu0 %v202
    %594 = vmatmul.mubr.bf16.gmra.mxu0 %v411
    %v595 = vpop.f32.mrf.mxu0
    %v596 = vadd.f32 %v416, %v595
    %v597 = vpop.f32.mrf.mxu0
    %v598 = vpop.f32.mrf.mxu0
    %v599 = vadd.f32 %v416, %v598
    %v600 = vpop.f32.mrf.mxu0
    %601 = vmatprep.mubr.bf16.mxu0 %v203
    %602 = vmatmul.mubr.bf16.gmra.mxu0 %v412
    %v603 = vpop.f32.mrf.mxu0
    %v604 = vadd.f32 %v416, %v603
    %v605 = vpop.f32.mrf.mxu0
    %v606 = vpop.f32.mrf.mxu0
    %v607 = vadd.f32 %v416, %v606
    %v608 = vpop.f32.mrf.mxu0
    %609 = vdwg.mxu0
    %v610 = vmax.f32 %v548, 0.0
    %v611 = vmax.f32 %v551, 0.0
    %v612 = vmax.f32 %v556, 0.0
    %v613 = vmax.f32 %v559, 0.0
    %v614 = vmax.f32 %v564, 0.0
    %v615 = vmax.f32 %v567, 0.0
    %v616 = vmax.f32 %v572, 0.0
    %v617 = vmax.f32 %v575, 0.0
    %v618 = vmax.f32 %v580, 0.0
    %v619 = vmax.f32 %v583, 0.0
    %v620 = vmax.f32 %v588, 0.0
    %v621 = vmax.f32 %v591, 0.0
    %v622 = vmax.f32 %v596, 0.0
    %v623 = vmax.f32 %v599, 0.0
    %v624 = vmax.f32 %v604, 0.0
    %v625 = vmax.f32 %v607, 0.0
    %v626 = vpack.c.bf16 %v611, %v610
    %v627 = vpack.c.bf16 %v613, %v612
    %v628 = vpack.c.bf16 %v615, %v614
    %v629 = vpack.c.bf16 %v617, %v616
    %v630 = vpack.c.bf16 %v619, %v618
    %v631 = vpack.c.bf16 %v621, %v620
    %v632 = vpack.c.bf16 %v623, %v622
    %v633 = vpack.c.bf16 %v625, %v624
    %v634 = vld [vmem:[#allocation2 + $0x80] sm:$0xf]
    %v635 = vld [vmem:[#allocation2 + $0x84] sm:$0xf]
    %v636 = vld [vmem:[#allocation2 + $0x88] sm:$0xf]
    %v637 = vld [vmem:[#allocation2 + $0x8c] sm:$0xf]
    %v638 = vld [vmem:[#allocation2 + $0x90] sm:$0xf]
    %v639 = vld [vmem:[#allocation2 + $0x94] sm:$0xf]
    %v640 = vld [vmem:[#allocation2 + $0x98] sm:$0xf]
    %v641 = vld [vmem:[#allocation2 + $0x9c] sm:$0xf]
    %v642 = vld [vmem:[#allocation2 + $0xa0] sm:$0xf]
    %v643 = vld [vmem:[#allocation2 + $0xa4] sm:$0xf]
    %v644 = vld [vmem:[#allocation2 + $0xa8] sm:$0xf]
    %v645 = vld [vmem:[#allocation2 + $0xac] sm:$0xf]
    %v646 = vld [vmem:[#allocation2 + $0xb0] sm:$0xf]
    %v647 = vld [vmem:[#allocation2 + $0xb4] sm:$0xf]
    %v648 = vld [vmem:[#allocation2 + $0xb8] sm:$0xf]
    %v649 = vld [vmem:[#allocation2 + $0xbc] sm:$0xf]
    %v650 = vld [vmem:[#allocation2 + $0xc0] sm:$0xf]
    %v651 = vld [vmem:[#allocation2 + $0xc4] sm:$0xf]
    %v652 = vld [vmem:[#allocation2 + $0xc8] sm:$0xf]
    %v653 = vld [vmem:[#allocation2 + $0xcc] sm:$0xf]
    %v654 = vld [vmem:[#allocation2 + $0xd0] sm:$0xf]
    %v655 = vld [vmem:[#allocation2 + $0xd4] sm:$0xf]
    %v656 = vld [vmem:[#allocation2 + $0xd8] sm:$0xf]
    %v657 = vld [vmem:[#allocation2 + $0xdc] sm:$0xf]
    %v658 = vld [vmem:[#allocation2 + $0xe0] sm:$0xf]
    %v659 = vld [vmem:[#allocation2 + $0xe4] sm:$0xf]
    %v660 = vld [vmem:[#allocation2 + $0xe8] sm:$0xf]
    %v661 = vld [vmem:[#allocation2 + $0xec] sm:$0xf]
    %v662 = vld [vmem:[#allocation2 + $0xf0] sm:$0xf]
    %v663 = vld [vmem:[#allocation2 + $0xf4] sm:$0xf]
    %v664 = vld [vmem:[#allocation2 + $0xf8] sm:$0xf]
    %v665 = vld [vmem:[#allocation2 + $0xfc] sm:$0xf]
    %v666 = vld [vmem:[%s4 + $0x1] sm:$0x1]
    %667 = vmatprep.subr.bf16.mxu0 0
    %668 = vmatpush1.bf16.msra.mxu0 %v633
    %669 = vmatprep.subr.bf16.mxu0 0
    %670 = vmatpush1.bf16.msra.mxu0 %v632
    %671 = vmatprep.subr.bf16.mxu0 0
    %672 = vmatpush1.bf16.msra.mxu0 %v631
    %673 = vmatprep.subr.bf16.mxu0 0
    %674 = vmatpush1.bf16.msra.mxu0 %v630
    %675 = vmatprep.subr.bf16.mxu0 0
    %676 = vmatpush1.bf16.msra.mxu0 %v629
    %677 = vmatprep.subr.bf16.mxu0 0
    %678 = vmatpush1.bf16.msra.mxu0 %v628
    %679 = vmatprep.subr.bf16.mxu0 0
    %680 = vmatpush1.bf16.msra.mxu0 %v627
    %681 = vmatprep.subr.bf16.mxu0 0
    %682 = vmatpush1.bf16.msra.mxu0 %v626
    %683 = vmatprep.subr.bf16.mxu0 0
    %684 = vmatpush2.bf16.msra.mxu0 0
    %685 = vmatprep.subr.bf16.mxu0 0
    %686 = vmatpush2.bf16.msra.mxu0 0
    %687 = vmatprep.subr.bf16.mxu0 0
    %688 = vmatpush2.bf16.msra.mxu0 0
    %689 = vmatprep.subr.bf16.mxu0 0
    %690 = vmatpush2.bf16.msra.mxu0 0
    %691 = vmatprep.subr.bf16.mxu0 0
    %692 = vmatpush2.bf16.msra.mxu0 0
    %693 = vmatprep.subr.bf16.mxu0 0
    %694 = vmatpush2.bf16.msra.mxu0 0
    %695 = vmatprep.subr.bf16.mxu0 0
    %696 = vmatpush2.bf16.msra.mxu0 0
    %697 = vmatprep.subr.bf16.mxu0 0
    %698 = vmatpush2.bf16.msra.mxu0 0
    %699 = vmatprep.mubr.bf16.mxu0 0
    %700 = vmatmul.mubr.bf16.gmra.mxu0 %v148
    %v701 = vpop.f32.mrf.mxu0
    %v702 = vadd.f32 0.0, %v701
    %v703 = vpop.f32.mrf.mxu0
    %v704 = vpop.f32.mrf.mxu0
    %v705 = vadd.f32 0.0, %v704
    %v706 = vpop.f32.mrf.mxu0
    %707 = vmatprep.mubr.bf16.mxu0 0
    %708 = vmatmul.mubr.bf16.gmra.mxu0 %v149
    %v709 = vpop.f32.mrf.mxu0
    %v710 = vadd.f32 0.0, %v709
    %v711 = vpop.f32.mrf.mxu0
    %v712 = vpop.f32.mrf.mxu0
    %v713 = vadd.f32 0.0, %v712
    %v714 = vpop.f32.mrf.mxu0
    %715 = vmatprep.mubr.bf16.mxu0 0
    %716 = vmatmul.mubr.bf16.gmra.mxu0 %v150
    %v717 = vpop.f32.mrf.mxu0
    %v718 = vadd.f32 0.0, %v717
    %v719 = vpop.f32.mrf.mxu0
    %v720 = vpop.f32.mrf.mxu0
    %v721 = vadd.f32 0.0, %v720
    %v722 = vpop.f32.mrf.mxu0
    %723 = vmatprep.mubr.bf16.mxu0 0
    %724 = vmatmul.mubr.bf16.gmra.mxu0 %v151
    %v725 = vpop.f32.mrf.mxu0
    %v726 = vadd.f32 0.0, %v725
    %v727 = vpop.f32.mrf.mxu0
    %v728 = vpop.f32.mrf.mxu0
    %v729 = vadd.f32 0.0, %v728
    %v730 = vpop.f32.mrf.mxu0
    %731 = vmatprep.mubr.bf16.mxu0 0
    %732 = vmatmul.mubr.bf16.gmra.mxu0 %v152
    %v733 = vpop.f32.mrf.mxu0
    %v734 = vadd.f32 0.0, %v733
    %v735 = vpop.f32.mrf.mxu0
    %v736 = vpop.f32.mrf.mxu0
    %v737 = vadd.f32 0.0, %v736
    %v738 = vpop.f32.mrf.mxu0
    %739 = vmatprep.mubr.bf16.mxu0 0
    %740 = vmatmul.mubr.bf16.gmra.mxu0 %v153
    %v741 = vpop.f32.mrf.mxu0
    %v742 = vadd.f32 0.0, %v741
    %v743 = vpop.f32.mrf.mxu0
    %v744 = vpop.f32.mrf.mxu0
    %v745 = vadd.f32 0.0, %v744
    %v746 = vpop.f32.mrf.mxu0
    %747 = vmatprep.mubr.bf16.mxu0 0
    %748 = vmatmul.mubr.bf16.gmra.mxu0 %v154
    %v749 = vpop.f32.mrf.mxu0
    %v750 = vadd.f32 0.0, %v749
    %v751 = vpop.f32.mrf.mxu0
    %v752 = vpop.f32.mrf.mxu0
    %v753 = vadd.f32 0.0, %v752
    %v754 = vpop.f32.mrf.mxu0
    %755 = vmatprep.mubr.bf16.mxu0 0
    %756 = vmatmul.mubr.bf16.gmra.mxu0 %v155
    %v757 = vpop.f32.mrf.mxu0
    %v758 = vadd.f32 0.0, %v757
    %v759 = vpop.f32.mrf.mxu0
    %v760 = vpop.f32.mrf.mxu0
    %v761 = vadd.f32 0.0, %v760
    %v762 = vpop.f32.mrf.mxu0
    %763 = vdwg.mxu0
    %v764 = vmul.f32 %v702, %v312
    %v765 = vmul.f32 %v705, %v317
    %v766 = vmul.f32 %v710, %v322
    %v767 = vmul.f32 %v713, %v327
    %v768 = vmul.f32 %v718, %v332
    %v769 = vmul.f32 %v721, %v337
    %v770 = vmul.f32 %v726, %v342
    %v771 = vmul.f32 %v729, %v347
    %v772 = vmul.f32 %v734, %v352
    %v773 = vmul.f32 %v737, %v357
    %v774 = vmul.f32 %v742, %v362
    %v775 = vmul.f32 %v745, %v367
    %v776 = vmul.f32 %v750, %v372
    %v777 = vmul.f32 %v753, %v377
    %v778 = vmul.f32 %v758, %v382
    %v779 = vmul.f32 %v761, %v387
    %v780 = vpack.c.bf16 %v765, %v764
    %v781 = vpack.c.bf16 %v767, %v766
    %v782 = vpack.c.bf16 %v769, %v768
    %v783 = vpack.c.bf16 %v771, %v770
    %v784 = vpack.c.bf16 %v773, %v772
    %v785 = vpack.c.bf16 %v775, %v774
    %v786 = vpack.c.bf16 %v777, %v776
    %v787 = vpack.c.bf16 %v779, %v778
    %v788 = vlaneseq
    %v789 = vshrl.u32 %v788, 7
    %v790 = vsub.s32 0, %v789
    %v791 = vrot.slane %v666, %v790
    %v824 = vunpack.c.l.b16 %v634
    %v825 = vunpack.c.l.b16 %v635
    %v826 = vunpack.c.l.b16 %v636
    %v827 = vunpack.c.l.b16 %v637
    %v828 = vunpack.c.l.b16 %v638
    %v829 = vunpack.c.l.b16 %v639
    %v830 = vunpack.c.l.b16 %v640
    %v831 = vunpack.c.l.b16 %v641
    %v832 = vunpack.c.l.b16 %v642
    %v833 = vunpack.c.l.b16 %v643
    %v834 = vunpack.c.l.b16 %v644
    %v835 = vunpack.c.l.b16 %v645
    %v836 = vunpack.c.l.b16 %v646
    %v837 = vunpack.c.l.b16 %v647
    %v838 = vunpack.c.l.b16 %v648
    %v839 = vunpack.c.l.b16 %v649
    %v840 = vunpack.c.l.b16 %v650
    %v841 = vunpack.c.l.b16 %v651
    %v842 = vunpack.c.l.b16 %v652
    %v843 = vunpack.c.l.b16 %v653
    %v844 = vunpack.c.l.b16 %v654
    %v845 = vunpack.c.l.b16 %v655
    %v846 = vunpack.c.l.b16 %v656
    %v847 = vunpack.c.l.b16 %v657
    %v848 = vunpack.c.l.b16 %v658
    %v849 = vunpack.c.l.b16 %v659
    %v850 = vunpack.c.l.b16 %v660
    %v851 = vunpack.c.l.b16 %v661
    %v852 = vunpack.c.l.b16 %v662
    %v853 = vunpack.c.l.b16 %v663
    %v854 = vunpack.c.l.b16 %v664
    %v855 = vunpack.c.l.b16 %v665
    %v856 = vpack.c.b16 %v825, %v824
    %v857 = vpack.c.b16 %v827, %v826
    %v858 = vpack.c.b16 %v829, %v828
    %v859 = vpack.c.b16 %v831, %v830
    %v860 = vpack.c.b16 %v833, %v832
    %v861 = vpack.c.b16 %v835, %v834
    %v862 = vpack.c.b16 %v837, %v836
    %v863 = vpack.c.b16 %v839, %v838
    %v864 = vpack.c.b16 %v841, %v840
    %v865 = vpack.c.b16 %v843, %v842
    %v866 = vpack.c.b16 %v845, %v844
    %v867 = vpack.c.b16 %v847, %v846
    %v868 = vpack.c.b16 %v849, %v848
    %v869 = vpack.c.b16 %v851, %v850
    %v870 = vpack.c.b16 %v853, %v852
    %v871 = vpack.c.b16 %v855, %v854
    %888 = vmatprep.subr.bf16.mxu0 0
    %889 = vmatpush1.bf16.msra.mxu0 %v863
    %890 = vmatprep.subr.bf16.mxu0 0
    %891 = vmatpush1.bf16.msra.mxu0 %v862
    %892 = vmatprep.subr.bf16.mxu0 0
    %893 = vmatpush1.bf16.msra.mxu0 %v861
    %894 = vmatprep.subr.bf16.mxu0 0
    %895 = vmatpush1.bf16.msra.mxu0 %v860
    %896 = vmatprep.subr.bf16.mxu0 0
    %897 = vmatpush1.bf16.msra.mxu0 %v859
    %898 = vmatprep.subr.bf16.mxu0 0
    %899 = vmatpush1.bf16.msra.mxu0 %v858
    %900 = vmatprep.subr.bf16.mxu0 0
    %901 = vmatpush1.bf16.msra.mxu0 %v857
    %902 = vmatprep.subr.bf16.mxu0 0
    %903 = vmatpush1.bf16.msra.mxu0 %v856
    %904 = vmatprep.subr.bf16.mxu0 0
    %905 = vmatpush2.bf16.msra.mxu0 %v871
    %906 = vmatprep.subr.bf16.mxu0 0
    %907 = vmatpush2.bf16.msra.mxu0 %v870
    %908 = vmatprep.subr.bf16.mxu0 0
    %909 = vmatpush2.bf16.msra.mxu0 %v869
    %910 = vmatprep.subr.bf16.mxu0 0
    %911 = vmatpush2.bf16.msra.mxu0 %v868
    %912 = vmatprep.subr.bf16.mxu0 0
    %913 = vmatpush2.bf16.msra.mxu0 %v867
    %914 = vmatprep.subr.bf16.mxu0 0
    %915 = vmatpush2.bf16.msra.mxu0 %v866
    %916 = vmatprep.subr.bf16.mxu0 0
    %917 = vmatpush2.bf16.msra.mxu0 %v865
    %918 = vmatprep.subr.bf16.mxu0 0
    %919 = vmatpush2.bf16.msra.mxu0 %v864
    %920 = vmatprep.mubr.bf16.mxu0 %v626
    %921 = vmatmul.mubr.bf16.gmra.mxu0 %v780
    %v922 = vpop.f32.mrf.mxu0
    %v923 = vadd.f32 %v791, %v922
    %v924 = vpop.f32.mrf.mxu0
    %v925 = vpop.f32.mrf.mxu0
    %v926 = vadd.f32 %v791, %v925
    %v927 = vpop.f32.mrf.mxu0
    %928 = vmatprep.mubr.bf16.mxu0 %v627
    %929 = vmatmul.mubr.bf16.gmra.mxu0 %v781
    %v930 = vpop.f32.mrf.mxu0
    %v931 = vadd.f32 %v791, %v930
    %v932 = vpop.f32.mrf.mxu0
    %v933 = vpop.f32.mrf.mxu0
    %v934 = vadd.f32 %v791, %v933
    %v935 = vpop.f32.mrf.mxu0
    %936 = vmatprep.mubr.bf16.mxu0 %v628
    %937 = vmatmul.mubr.bf16.gmra.mxu0 %v782
    %v938 = vpop.f32.mrf.mxu0
    %v939 = vadd.f32 %v791, %v938
    %v940 = vpop.f32.mrf.mxu0
    %v941 = vpop.f32.mrf.mxu0
    %v942 = vadd.f32 %v791, %v941
    %v943 = vpop.f32.mrf.mxu0
    %944 = vmatprep.mubr.bf16.mxu0 %v629
    %945 = vmatmul.mubr.bf16.gmra.mxu0 %v783
    %v946 = vpop.f32.mrf.mxu0
    %v947 = vadd.f32 %v791, %v946
    %v948 = vpop.f32.mrf.mxu0
    %v949 = vpop.f32.mrf.mxu0
    %v950 = vadd.f32 %v791, %v949
    %v951 = vpop.f32.mrf.mxu0
    %952 = vmatprep.mubr.bf16.mxu0 %v630
    %953 = vmatmul.mubr.bf16.gmra.mxu0 %v784
    %v954 = vpop.f32.mrf.mxu0
    %v955 = vadd.f32 %v791, %v954
    %v956 = vpop.f32.mrf.mxu0
    %v957 = vpop.f32.mrf.mxu0
    %v958 = vadd.f32 %v791, %v957
    %v959 = vpop.f32.mrf.mxu0
    %960 = vmatprep.mubr.bf16.mxu0 %v631
    %961 = vmatmul.mubr.bf16.gmra.mxu0 %v785
    %v962 = vpop.f32.mrf.mxu0
    %v963 = vadd.f32 %v791, %v962
    %v964 = vpop.f32.mrf.mxu0
    %v965 = vpop.f32.mrf.mxu0
    %v966 = vadd.f32 %v791, %v965
    %v967 = vpop.f32.mrf.mxu0
    %968 = vmatprep.mubr.bf16.mxu0 %v632
    %969 = vmatmul.mubr.bf16.gmra.mxu0 %v786
    %v970 = vpop.f32.mrf.mxu0
    %v971 = vadd.f32 %v791, %v970
    %v972 = vpop.f32.mrf.mxu0
    %v973 = vpop.f32.mrf.mxu0
    %v974 = vadd.f32 %v791, %v973
    %v975 = vpop.f32.mrf.mxu0
    %976 = vmatprep.mubr.bf16.mxu0 %v633
    %977 = vmatmul.mubr.bf16.gmra.mxu0 %v787
    %v978 = vpop.f32.mrf.mxu0
    %v979 = vadd.f32 %v791, %v978
    %v980 = vpop.f32.mrf.mxu0
    %v981 = vpop.f32.mrf.mxu0
    %v982 = vadd.f32 %v791, %v981
    %v983 = vpop.f32.mrf.mxu0
    %984 = vdwg.mxu0
    %v985 = vmax.f32 %v923, 0.0
    %v986 = vmax.f32 %v926, 0.0
    %v987 = vmax.f32 %v931, 0.0
    %v988 = vmax.f32 %v934, 0.0
    %v989 = vmax.f32 %v939, 0.0
    %v990 = vmax.f32 %v942, 0.0
    %v991 = vmax.f32 %v947, 0.0
    %v992 = vmax.f32 %v950, 0.0
    %v993 = vmax.f32 %v955, 0.0
    %v994 = vmax.f32 %v958, 0.0
    %v995 = vmax.f32 %v963, 0.0
    %v996 = vmax.f32 %v966, 0.0
    %v997 = vmax.f32 %v971, 0.0
    %v998 = vmax.f32 %v974, 0.0
    %v999 = vmax.f32 %v979, 0.0
    %v1000 = vmax.f32 %v982, 0.0
    %v1001 = vpack.c.bf16 %v986, %v985
    %v1002 = vpack.c.bf16 %v988, %v987
    %v1003 = vpack.c.bf16 %v990, %v989
    %v1004 = vpack.c.bf16 %v992, %v991
    %v1005 = vpack.c.bf16 %v994, %v993
    %v1006 = vpack.c.bf16 %v996, %v995
    %v1007 = vpack.c.bf16 %v998, %v997
    %v1008 = vpack.c.bf16 %v1000, %v999
    %v1009 = vld [vmem:[#allocation2 + $0x100] sm:$0xf]
    %v1010 = vld [vmem:[#allocation2 + $0x104] sm:$0xf]
    %v1011 = vld [vmem:[#allocation2 + $0x108] sm:$0xf]
    %v1012 = vld [vmem:[#allocation2 + $0x10c] sm:$0xf]
    %v1013 = vld [vmem:[#allocation2 + $0x110] sm:$0xf]
    %v1014 = vld [vmem:[#allocation2 + $0x114] sm:$0xf]
    %v1015 = vld [vmem:[#allocation2 + $0x118] sm:$0xf]
    %v1016 = vld [vmem:[#allocation2 + $0x11c] sm:$0xf]
    %v1017 = vld [vmem:[#allocation2 + $0x120] sm:$0xf]
    %v1018 = vld [vmem:[#allocation2 + $0x124] sm:$0xf]
    %v1019 = vld [vmem:[#allocation2 + $0x128] sm:$0xf]
    %v1020 = vld [vmem:[#allocation2 + $0x12c] sm:$0xf]
    %v1021 = vld [vmem:[#allocation2 + $0x130] sm:$0xf]
    %v1022 = vld [vmem:[#allocation2 + $0x134] sm:$0xf]
    %v1023 = vld [vmem:[#allocation2 + $0x138] sm:$0xf]
    %v1024 = vld [vmem:[#allocation2 + $0x13c] sm:$0xf]
    %v1025 = vld [vmem:[#allocation2 + $0x140] sm:$0xf]
    %v1026 = vld [vmem:[#allocation2 + $0x144] sm:$0xf]
    %v1027 = vld [vmem:[#allocation2 + $0x148] sm:$0xf]
    %v1028 = vld [vmem:[#allocation2 + $0x14c] sm:$0xf]
    %v1029 = vld [vmem:[#allocation2 + $0x150] sm:$0xf]
    %v1030 = vld [vmem:[#allocation2 + $0x154] sm:$0xf]
    %v1031 = vld [vmem:[#allocation2 + $0x158] sm:$0xf]
    %v1032 = vld [vmem:[#allocation2 + $0x15c] sm:$0xf]
    %v1033 = vld [vmem:[#allocation2 + $0x160] sm:$0xf]
    %v1034 = vld [vmem:[#allocation2 + $0x164] sm:$0xf]
    %v1035 = vld [vmem:[#allocation2 + $0x168] sm:$0xf]
    %v1036 = vld [vmem:[#allocation2 + $0x16c] sm:$0xf]
    %v1037 = vld [vmem:[#allocation2 + $0x170] sm:$0xf]
    %v1038 = vld [vmem:[#allocation2 + $0x174] sm:$0xf]
    %v1039 = vld [vmem:[#allocation2 + $0x178] sm:$0xf]
    %v1040 = vld [vmem:[#allocation2 + $0x17c] sm:$0xf]
    %v1041 = vld [vmem:[%s4 + $0x2] sm:$0x1]
    %1042 = vmatprep.subr.bf16.mxu0 0
    %1043 = vmatpush1.bf16.msra.mxu0 %v1008
    %1044 = vmatprep.subr.bf16.mxu0 0
    %1045 = vmatpush1.bf16.msra.mxu0 %v1007
    %1046 = vmatprep.subr.bf16.mxu0 0
    %1047 = vmatpush1.bf16.msra.mxu0 %v1006
    %1048 = vmatprep.subr.bf16.mxu0 0
    %1049 = vmatpush1.bf16.msra.mxu0 %v1005
    %1050 = vmatprep.subr.bf16.mxu0 0
    %1051 = vmatpush1.bf16.msra.mxu0 %v1004
    %1052 = vmatprep.subr.bf16.mxu0 0
    %1053 = vmatpush1.bf16.msra.mxu0 %v1003
    %1054 = vmatprep.subr.bf16.mxu0 0
    %1055 = vmatpush1.bf16.msra.mxu0 %v1002
    %1056 = vmatprep.subr.bf16.mxu0 0
    %1057 = vmatpush1.bf16.msra.mxu0 %v1001
    %1058 = vmatprep.subr.bf16.mxu0 0
    %1059 = vmatpush2.bf16.msra.mxu0 0
    %1060 = vmatprep.subr.bf16.mxu0 0
    %1061 = vmatpush2.bf16.msra.mxu0 0
    %1062 = vmatprep.subr.bf16.mxu0 0
    %1063 = vmatpush2.bf16.msra.mxu0 0
    %1064 = vmatprep.subr.bf16.mxu0 0
    %1065 = vmatpush2.bf16.msra.mxu0 0
    %1066 = vmatprep.subr.bf16.mxu0 0
    %1067 = vmatpush2.bf16.msra.mxu0 0
    %1068 = vmatprep.subr.bf16.mxu0 0
    %1069 = vmatpush2.bf16.msra.mxu0 0
    %1070 = vmatprep.subr.bf16.mxu0 0
    %1071 = vmatpush2.bf16.msra.mxu0 0
    %1072 = vmatprep.subr.bf16.mxu0 0
    %1073 = vmatpush2.bf16.msra.mxu0 0
    %1074 = vmatprep.mubr.bf16.mxu0 0
    %1075 = vmatmul.mubr.bf16.gmra.mxu0 %v148
    %v1076 = vpop.f32.mrf.mxu0
    %v1077 = vadd.f32 0.0, %v1076
    %v1078 = vpop.f32.mrf.mxu0
    %v1079 = vpop.f32.mrf.mxu0
    %v1080 = vadd.f32 0.0, %v1079
    %v1081 = vpop.f32.mrf.mxu0
    %1082 = vmatprep.mubr.bf16.mxu0 0
    %1083 = vmatmul.mubr.bf16.gmra.mxu0 %v149
    %v1084 = vpop.f32.mrf.mxu0
    %v1085 = vadd.f32 0.0, %v1084
    %v1086 = vpop.f32.mrf.mxu0
    %v1087 = vpop.f32.mrf.mxu0
    %v1088 = vadd.f32 0.0, %v1087
    %v1089 = vpop.f32.mrf.mxu0
    %1090 = vmatprep.mubr.bf16.mxu0 0
    %1091 = vmatmul.mubr.bf16.gmra.mxu0 %v150
    %v1092 = vpop.f32.mrf.mxu0
    %v1093 = vadd.f32 0.0, %v1092
    %v1094 = vpop.f32.mrf.mxu0
    %v1095 = vpop.f32.mrf.mxu0
    %v1096 = vadd.f32 0.0, %v1095
    %v1097 = vpop.f32.mrf.mxu0
    %1098 = vmatprep.mubr.bf16.mxu0 0
    %1099 = vmatmul.mubr.bf16.gmra.mxu0 %v151
    %v1100 = vpop.f32.mrf.mxu0
    %v1101 = vadd.f32 0.0, %v1100
    %v1102 = vpop.f32.mrf.mxu0
    %v1103 = vpop.f32.mrf.mxu0
    %v1104 = vadd.f32 0.0, %v1103
    %v1105 = vpop.f32.mrf.mxu0
    %1106 = vmatprep.mubr.bf16.mxu0 0
    %1107 = vmatmul.mubr.bf16.gmra.mxu0 %v152
    %v1108 = vpop.f32.mrf.mxu0
    %v1109 = vadd.f32 0.0, %v1108
    %v1110 = vpop.f32.mrf.mxu0
    %v1111 = vpop.f32.mrf.mxu0
    %v1112 = vadd.f32 0.0, %v1111
    %v1113 = vpop.f32.mrf.mxu0
    %1114 = vmatprep.mubr.bf16.mxu0 0
    %1115 = vmatmul.mubr.bf16.gmra.mxu0 %v153
    %v1116 = vpop.f32.mrf.mxu0
    %v1117 = vadd.f32 0.0, %v1116
    %v1118 = vpop.f32.mrf.mxu0
    %v1119 = vpop.f32.mrf.mxu0
    %v1120 = vadd.f32 0.0, %v1119
    %v1121 = vpop.f32.mrf.mxu0
    %1122 = vmatprep.mubr.bf16.mxu0 0
    %1123 = vmatmul.mubr.bf16.gmra.mxu0 %v154
    %v1124 = vpop.f32.mrf.mxu0
    %v1125 = vadd.f32 0.0, %v1124
    %v1126 = vpop.f32.mrf.mxu0
    %v1127 = vpop.f32.mrf.mxu0
    %v1128 = vadd.f32 0.0, %v1127
    %v1129 = vpop.f32.mrf.mxu0
    %1130 = vmatprep.mubr.bf16.mxu0 0
    %1131 = vmatmul.mubr.bf16.gmra.mxu0 %v155
    %v1132 = vpop.f32.mrf.mxu0
    %v1133 = vadd.f32 0.0, %v1132
    %v1134 = vpop.f32.mrf.mxu0
    %v1135 = vpop.f32.mrf.mxu0
    %v1136 = vadd.f32 0.0, %v1135
    %v1137 = vpop.f32.mrf.mxu0
    %1138 = vdwg.mxu0
    %v1139 = vmul.f32 %v1077, %v312
    %v1140 = vmul.f32 %v1080, %v317
    %v1141 = vmul.f32 %v1085, %v322
    %v1142 = vmul.f32 %v1088, %v327
    %v1143 = vmul.f32 %v1093, %v332
    %v1144 = vmul.f32 %v1096, %v337
    %v1145 = vmul.f32 %v1101, %v342
    %v1146 = vmul.f32 %v1104, %v347
    %v1147 = vmul.f32 %v1109, %v352
    %v1148 = vmul.f32 %v1112, %v357
    %v1149 = vmul.f32 %v1117, %v362
    %v1150 = vmul.f32 %v1120, %v367
    %v1151 = vmul.f32 %v1125, %v372
    %v1152 = vmul.f32 %v1128, %v377
    %v1153 = vmul.f32 %v1133, %v382
    %v1154 = vmul.f32 %v1136, %v387
    %v1155 = vpack.c.bf16 %v1140, %v1139
    %v1156 = vpack.c.bf16 %v1142, %v1141
    %v1157 = vpack.c.bf16 %v1144, %v1143
    %v1158 = vpack.c.bf16 %v1146, %v1145
    %v1159 = vpack.c.bf16 %v1148, %v1147
    %v1160 = vpack.c.bf16 %v1150, %v1149
    %v1161 = vpack.c.bf16 %v1152, %v1151
    %v1162 = vpack.c.bf16 %v1154, %v1153
    %v1163 = vlaneseq
    %v1164 = vshrl.u32 %v1163, 7
    %v1165 = vsub.s32 0, %v1164
    %v1166 = vrot.slane %v1041, %v1165
    %v1199 = vunpack.c.l.b16 %v1009
    %v1200 = vunpack.c.l.b16 %v1010
    %v1201 = vunpack.c.l.b16 %v1011
    %v1202 = vunpack.c.l.b16 %v1012
    %v1203 = vunpack.c.l.b16 %v1013
    %v1204 = vunpack.c.l.b16 %v1014
    %v1205 = vunpack.c.l.b16 %v1015
    %v1206 = vunpack.c.l.b16 %v1016
    %v1207 = vunpack.c.l.b16 %v1017
    %v1208 = vunpack.c.l.b16 %v1018
    %v1209 = vunpack.c.l.b16 %v1019
    %v1210 = vunpack.c.l.b16 %v1020
    %v1211 = vunpack.c.l.b16 %v1021
    %v1212 = vunpack.c.l.b16 %v1022
    %v1213 = vunpack.c.l.b16 %v1023
    %v1214 = vunpack.c.l.b16 %v1024
    %v1215 = vunpack.c.l.b16 %v1025
    %v1216 = vunpack.c.l.b16 %v1026
    %v1217 = vunpack.c.l.b16 %v1027
    %v1218 = vunpack.c.l.b16 %v1028
    %v1219 = vunpack.c.l.b16 %v1029
    %v1220 = vunpack.c.l.b16 %v1030
    %v1221 = vunpack.c.l.b16 %v1031
    %v1222 = vunpack.c.l.b16 %v1032
    %v1223 = vunpack.c.l.b16 %v1033
    %v1224 = vunpack.c.l.b16 %v1034
    %v1225 = vunpack.c.l.b16 %v1035
    %v1226 = vunpack.c.l.b16 %v1036
    %v1227 = vunpack.c.l.b16 %v1037
    %v1228 = vunpack.c.l.b16 %v1038
    %v1229 = vunpack.c.l.b16 %v1039
    %v1230 = vunpack.c.l.b16 %v1040
    %v1231 = vpack.c.b16 %v1200, %v1199
    %v1232 = vpack.c.b16 %v1202, %v1201
    %v1233 = vpack.c.b16 %v1204, %v1203
    %v1234 = vpack.c.b16 %v1206, %v1205
    %v1235 = vpack.c.b16 %v1208, %v1207
    %v1236 = vpack.c.b16 %v1210, %v1209
    %v1237 = vpack.c.b16 %v1212, %v1211
    %v1238 = vpack.c.b16 %v1214, %v1213
    %v1239 = vpack.c.b16 %v1216, %v1215
    %v1240 = vpack.c.b16 %v1218, %v1217
    %v1241 = vpack.c.b16 %v1220, %v1219
    %v1242 = vpack.c.b16 %v1222, %v1221
    %v1243 = vpack.c.b16 %v1224, %v1223
    %v1244 = vpack.c.b16 %v1226, %v1225
    %v1245 = vpack.c.b16 %v1228, %v1227
    %v1246 = vpack.c.b16 %v1230, %v1229
    %1263 = vmatprep.subr.bf16.mxu0 0
    %1264 = vmatpush1.bf16.msra.mxu0 %v1238
    %1265 = vmatprep.subr.bf16.mxu0 0
    %1266 = vmatpush1.bf16.msra.mxu0 %v1237
    %1267 = vmatprep.subr.bf16.mxu0 0
    %1268 = vmatpush1.bf16.msra.mxu0 %v1236
    %1269 = vmatprep.subr.bf16.mxu0 0
    %1270 = vmatpush1.bf16.msra.mxu0 %v1235
    %1271 = vmatprep.subr.bf16.mxu0 0
    %1272 = vmatpush1.bf16.msra.mxu0 %v1234
    %1273 = vmatprep.subr.bf16.mxu0 0
    %1274 = vmatpush1.bf16.msra.mxu0 %v1233
    %1275 = vmatprep.subr.bf16.mxu0 0
    %1276 = vmatpush1.bf16.msra.mxu0 %v1232
    %1277 = vmatprep.subr.bf16.mxu0 0
    %1278 = vmatpush1.bf16.msra.mxu0 %v1231
    %1279 = vmatprep.subr.bf16.mxu0 0
    %1280 = vmatpush2.bf16.msra.mxu0 %v1246
    %1281 = vmatprep.subr.bf16.mxu0 0
    %1282 = vmatpush2.bf16.msra.mxu0 %v1245
    %1283 = vmatprep.subr.bf16.mxu0 0
    %1284 = vmatpush2.bf16.msra.mxu0 %v1244
    %1285 = vmatprep.subr.bf16.mxu0 0
    %1286 = vmatpush2.bf16.msra.mxu0 %v1243
    %1287 = vmatprep.subr.bf16.mxu0 0
    %1288 = vmatpush2.bf16.msra.mxu0 %v1242
    %1289 = vmatprep.subr.bf16.mxu0 0
    %1290 = vmatpush2.bf16.msra.mxu0 %v1241
    %1291 = vmatprep.subr.bf16.mxu0 0
    %1292 = vmatpush2.bf16.msra.mxu0 %v1240
    %1293 = vmatprep.subr.bf16.mxu0 0
    %1294 = vmatpush2.bf16.msra.mxu0 %v1239
    %1295 = vmatprep.mubr.bf16.mxu0 %v1001
    %1296 = vmatmul.mubr.bf16.gmra.mxu0 %v1155
    %v1297 = vpop.f32.mrf.mxu0
    %v1298 = vadd.f32 %v1166, %v1297
    %v1299 = vpop.f32.mrf.mxu0
    %v1300 = vpop.f32.mrf.mxu0
    %v1301 = vadd.f32 %v1166, %v1300
    %v1302 = vpop.f32.mrf.mxu0
    %1303 = vmatprep.mubr.bf16.mxu0 %v1002
    %1304 = vmatmul.mubr.bf16.gmra.mxu0 %v1156
    %v1305 = vpop.f32.mrf.mxu0
    %v1306 = vadd.f32 %v1166, %v1305
    %v1307 = vpop.f32.mrf.mxu0
    %v1308 = vpop.f32.mrf.mxu0
    %v1309 = vadd.f32 %v1166, %v1308
    %v1310 = vpop.f32.mrf.mxu0
    %1311 = vmatprep.mubr.bf16.mxu0 %v1003
    %1312 = vmatmul.mubr.bf16.gmra.mxu0 %v1157
    %v1313 = vpop.f32.mrf.mxu0
    %v1314 = vadd.f32 %v1166, %v1313
    %v1315 = vpop.f32.mrf.mxu0
    %v1316 = vpop.f32.mrf.mxu0
    %v1317 = vadd.f32 %v1166, %v1316
    %v1318 = vpop.f32.mrf.mxu0
    %1319 = vmatprep.mubr.bf16.mxu0 %v1004
    %1320 = vmatmul.mubr.bf16.gmra.mxu0 %v1158
    %v1321 = vpop.f32.mrf.mxu0
    %v1322 = vadd.f32 %v1166, %v1321
    %v1323 = vpop.f32.mrf.mxu0
    %v1324 = vpop.f32.mrf.mxu0
    %v1325 = vadd.f32 %v1166, %v1324
    %v1326 = vpop.f32.mrf.mxu0
    %1327 = vmatprep.mubr.bf16.mxu0 %v1005
    %1328 = vmatmul.mubr.bf16.gmra.mxu0 %v1159
    %v1329 = vpop.f32.mrf.mxu0
    %v1330 = vadd.f32 %v1166, %v1329
    %v1331 = vpop.f32.mrf.mxu0
    %v1332 = vpop.f32.mrf.mxu0
    %v1333 = vadd.f32 %v1166, %v1332
    %v1334 = vpop.f32.mrf.mxu0
    %1335 = vmatprep.mubr.bf16.mxu0 %v1006
    %1336 = vmatmul.mubr.bf16.gmra.mxu0 %v1160
    %v1337 = vpop.f32.mrf.mxu0
    %v1338 = vadd.f32 %v1166, %v1337
    %v1339 = vpop.f32.mrf.mxu0
    %v1340 = vpop.f32.mrf.mxu0
    %v1341 = vadd.f32 %v1166, %v1340
    %v1342 = vpop.f32.mrf.mxu0
    %1343 = vmatprep.mubr.bf16.mxu0 %v1007
    %1344 = vmatmul.mubr.bf16.gmra.mxu0 %v1161
    %v1345 = vpop.f32.mrf.mxu0
    %v1346 = vadd.f32 %v1166, %v1345
    %v1347 = vpop.f32.mrf.mxu0
    %v1348 = vpop.f32.mrf.mxu0
    %v1349 = vadd.f32 %v1166, %v1348
    %v1350 = vpop.f32.mrf.mxu0
    %1351 = vmatprep.mubr.bf16.mxu0 %v1008
    %1352 = vmatmul.mubr.bf16.gmra.mxu0 %v1162
    %v1353 = vpop.f32.mrf.mxu0
    %v1354 = vadd.f32 %v1166, %v1353
    %v1355 = vpop.f32.mrf.mxu0
    %v1356 = vpop.f32.mrf.mxu0
    %v1357 = vadd.f32 %v1166, %v1356
    %v1358 = vpop.f32.mrf.mxu0
    %1359 = vdwg.mxu0
    %v1360 = vmax.f32 %v1298, 0.0
    %v1361 = vmax.f32 %v1301, 0.0
    %v1362 = vmax.f32 %v1306, 0.0
    %v1363 = vmax.f32 %v1309, 0.0
    %v1364 = vmax.f32 %v1314, 0.0
    %v1365 = vmax.f32 %v1317, 0.0
    %v1366 = vmax.f32 %v1322, 0.0
    %v1367 = vmax.f32 %v1325, 0.0
    %v1368 = vmax.f32 %v1330, 0.0
    %v1369 = vmax.f32 %v1333, 0.0
    %v1370 = vmax.f32 %v1338, 0.0
    %v1371 = vmax.f32 %v1341, 0.0
    %v1372 = vmax.f32 %v1346, 0.0
    %v1373 = vmax.f32 %v1349, 0.0
    %v1374 = vmax.f32 %v1354, 0.0
    %v1375 = vmax.f32 %v1357, 0.0
    %v1376 = vpack.c.bf16 %v1361, %v1360
    %v1377 = vpack.c.bf16 %v1363, %v1362
    %v1378 = vpack.c.bf16 %v1365, %v1364
    %v1379 = vpack.c.bf16 %v1367, %v1366
    %v1380 = vpack.c.bf16 %v1369, %v1368
    %v1381 = vpack.c.bf16 %v1371, %v1370
    %v1382 = vpack.c.bf16 %v1373, %v1372
    %v1383 = vpack.c.bf16 %v1375, %v1374
    %v1384 = vld [vmem:[#allocation2 + $0x180] sm:$0xf]
    %v1385 = vld [vmem:[#allocation2 + $0x184] sm:$0xf]
    %v1386 = vld [vmem:[#allocation2 + $0x188] sm:$0xf]
    %v1387 = vld [vmem:[#allocation2 + $0x18c] sm:$0xf]
    %v1388 = vld [vmem:[#allocation2 + $0x190] sm:$0xf]
    %v1389 = vld [vmem:[#allocation2 + $0x194] sm:$0xf]
    %v1390 = vld [vmem:[#allocation2 + $0x198] sm:$0xf]
    %v1391 = vld [vmem:[#allocation2 + $0x19c] sm:$0xf]
    %v1392 = vld [vmem:[#allocation2 + $0x1a0] sm:$0xf]
    %v1393 = vld [vmem:[#allocation2 + $0x1a4] sm:$0xf]
    %v1394 = vld [vmem:[#allocation2 + $0x1a8] sm:$0xf]
    %v1395 = vld [vmem:[#allocation2 + $0x1ac] sm:$0xf]
    %v1396 = vld [vmem:[#allocation2 + $0x1b0] sm:$0xf]
    %v1397 = vld [vmem:[#allocation2 + $0x1b4] sm:$0xf]
    %v1398 = vld [vmem:[#allocation2 + $0x1b8] sm:$0xf]
    %v1399 = vld [vmem:[#allocation2 + $0x1bc] sm:$0xf]
    %v1400 = vld [vmem:[#allocation2 + $0x1c0] sm:$0xf]
    %v1401 = vld [vmem:[#allocation2 + $0x1c4] sm:$0xf]
    %v1402 = vld [vmem:[#allocation2 + $0x1c8] sm:$0xf]
    %v1403 = vld [vmem:[#allocation2 + $0x1cc] sm:$0xf]
    %v1404 = vld [vmem:[#allocation2 + $0x1d0] sm:$0xf]
    %v1405 = vld [vmem:[#allocation2 + $0x1d4] sm:$0xf]
    %v1406 = vld [vmem:[#allocation2 + $0x1d8] sm:$0xf]
    %v1407 = vld [vmem:[#allocation2 + $0x1dc] sm:$0xf]
    %v1408 = vld [vmem:[#allocation2 + $0x1e0] sm:$0xf]
    %v1409 = vld [vmem:[#allocation2 + $0x1e4] sm:$0xf]
    %v1410 = vld [vmem:[#allocation2 + $0x1e8] sm:$0xf]
    %v1411 = vld [vmem:[#allocation2 + $0x1ec] sm:$0xf]
    %v1412 = vld [vmem:[#allocation2 + $0x1f0] sm:$0xf]
    %v1413 = vld [vmem:[#allocation2 + $0x1f4] sm:$0xf]
    %v1414 = vld [vmem:[#allocation2 + $0x1f8] sm:$0xf]
    %v1415 = vld [vmem:[#allocation2 + $0x1fc] sm:$0xf]
    %v1416 = vld [vmem:[%s4 + $0x3] sm:$0x1]
    %1417 = vmatprep.subr.bf16.mxu0 0
    %1418 = vmatpush1.bf16.msra.mxu0 %v1383
    %1419 = vmatprep.subr.bf16.mxu0 0
    %1420 = vmatpush1.bf16.msra.mxu0 %v1382
    %1421 = vmatprep.subr.bf16.mxu0 0
    %1422 = vmatpush1.bf16.msra.mxu0 %v1381
    %1423 = vmatprep.subr.bf16.mxu0 0
    %1424 = vmatpush1.bf16.msra.mxu0 %v1380
    %1425 = vmatprep.subr.bf16.mxu0 0
    %1426 = vmatpush1.bf16.msra.mxu0 %v1379
    %1427 = vmatprep.subr.bf16.mxu0 0
    %1428 = vmatpush1.bf16.msra.mxu0 %v1378
    %1429 = vmatprep.subr.bf16.mxu0 0
    %1430 = vmatpush1.bf16.msra.mxu0 %v1377
    %1431 = vmatprep.subr.bf16.mxu0 0
    %1432 = vmatpush1.bf16.msra.mxu0 %v1376
    %1433 = vmatprep.subr.bf16.mxu0 0
    %1434 = vmatpush2.bf16.msra.mxu0 0
    %1435 = vmatprep.subr.bf16.mxu0 0
    %1436 = vmatpush2.bf16.msra.mxu0 0
    %1437 = vmatprep.subr.bf16.mxu0 0
    %1438 = vmatpush2.bf16.msra.mxu0 0
    %1439 = vmatprep.subr.bf16.mxu0 0
    %1440 = vmatpush2.bf16.msra.mxu0 0
    %1441 = vmatprep.subr.bf16.mxu0 0
    %1442 = vmatpush2.bf16.msra.mxu0 0
    %1443 = vmatprep.subr.bf16.mxu0 0
    %1444 = vmatpush2.bf16.msra.mxu0 0
    %1445 = vmatprep.subr.bf16.mxu0 0
    %1446 = vmatpush2.bf16.msra.mxu0 0
    %1447 = vmatprep.subr.bf16.mxu0 0
    %1448 = vmatpush2.bf16.msra.mxu0 0
    %1449 = vmatprep.mubr.bf16.mxu0 0
    %1450 = vmatmul.mubr.bf16.gmra.mxu0 %v148
    %v1451 = vpop.f32.mrf.mxu0
    %v1452 = vadd.f32 0.0, %v1451
    %v1453 = vpop.f32.mrf.mxu0
    %v1454 = vpop.f32.mrf.mxu0
    %v1455 = vadd.f32 0.0, %v1454
    %v1456 = vpop.f32.mrf.mxu0
    %1457 = vmatprep.mubr.bf16.mxu0 0
    %1458 = vmatmul.mubr.bf16.gmra.mxu0 %v149
    %v1459 = vpop.f32.mrf.mxu0
    %v1460 = vadd.f32 0.0, %v1459
    %v1461 = vpop.f32.mrf.mxu0
    %v1462 = vpop.f32.mrf.mxu0
    %v1463 = vadd.f32 0.0, %v1462
    %v1464 = vpop.f32.mrf.mxu0
    %1465 = vmatprep.mubr.bf16.mxu0 0
    %1466 = vmatmul.mubr.bf16.gmra.mxu0 %v150
    %v1467 = vpop.f32.mrf.mxu0
    %v1468 = vadd.f32 0.0, %v1467
    %v1469 = vpop.f32.mrf.mxu0
    %v1470 = vpop.f32.mrf.mxu0
    %v1471 = vadd.f32 0.0, %v1470
    %v1472 = vpop.f32.mrf.mxu0
    %1473 = vmatprep.mubr.bf16.mxu0 0
    %1474 = vmatmul.mubr.bf16.gmra.mxu0 %v151
    %v1475 = vpop.f32.mrf.mxu0
    %v1476 = vadd.f32 0.0, %v1475
    %v1477 = vpop.f32.mrf.mxu0
    %v1478 = vpop.f32.mrf.mxu0
    %v1479 = vadd.f32 0.0, %v1478
    %v1480 = vpop.f32.mrf.mxu0
    %1481 = vmatprep.mubr.bf16.mxu0 0
    %1482 = vmatmul.mubr.bf16.gmra.mxu0 %v152
    %v1483 = vpop.f32.mrf.mxu0
    %v1484 = vadd.f32 0.0, %v1483
    %v1485 = vpop.f32.mrf.mxu0
    %v1486 = vpop.f32.mrf.mxu0
    %v1487 = vadd.f32 0.0, %v1486
    %v1488 = vpop.f32.mrf.mxu0
    %1489 = vmatprep.mubr.bf16.mxu0 0
    %1490 = vmatmul.mubr.bf16.gmra.mxu0 %v153
    %v1491 = vpop.f32.mrf.mxu0
    %v1492 = vadd.f32 0.0, %v1491
    %v1493 = vpop.f32.mrf.mxu0
    %v1494 = vpop.f32.mrf.mxu0
    %v1495 = vadd.f32 0.0, %v1494
    %v1496 = vpop.f32.mrf.mxu0
    %1497 = vmatprep.mubr.bf16.mxu0 0
    %1498 = vmatmul.mubr.bf16.gmra.mxu0 %v154
    %v1499 = vpop.f32.mrf.mxu0
    %v1500 = vadd.f32 0.0, %v1499
    %v1501 = vpop.f32.mrf.mxu0
    %v1502 = vpop.f32.mrf.mxu0
    %v1503 = vadd.f32 0.0, %v1502
    %v1504 = vpop.f32.mrf.mxu0
    %1505 = vmatprep.mubr.bf16.mxu0 0
    %1506 = vmatmul.mubr.bf16.gmra.mxu0 %v155
    %v1507 = vpop.f32.mrf.mxu0
    %v1508 = vadd.f32 0.0, %v1507
    %v1509 = vpop.f32.mrf.mxu0
    %v1510 = vpop.f32.mrf.mxu0
    %v1511 = vadd.f32 0.0, %v1510
    %v1512 = vpop.f32.mrf.mxu0
    %1513 = vdwg.mxu0
    %v1514 = vmul.f32 %v1452, %v312
    %v1515 = vmul.f32 %v1455, %v317
    %v1516 = vmul.f32 %v1460, %v322
    %v1517 = vmul.f32 %v1463, %v327
    %v1518 = vmul.f32 %v1468, %v332
    %v1519 = vmul.f32 %v1471, %v337
    %v1520 = vmul.f32 %v1476, %v342
    %v1521 = vmul.f32 %v1479, %v347
    %v1522 = vmul.f32 %v1484, %v352
    %v1523 = vmul.f32 %v1487, %v357
    %v1524 = vmul.f32 %v1492, %v362
    %v1525 = vmul.f32 %v1495, %v367
    %v1526 = vmul.f32 %v1500, %v372
    %v1527 = vmul.f32 %v1503, %v377
    %v1528 = vmul.f32 %v1508, %v382
    %v1529 = vmul.f32 %v1511, %v387
    %v1530 = vpack.c.bf16 %v1515, %v1514
    %v1531 = vpack.c.bf16 %v1517, %v1516
    %v1532 = vpack.c.bf16 %v1519, %v1518
    %v1533 = vpack.c.bf16 %v1521, %v1520
    %v1534 = vpack.c.bf16 %v1523, %v1522
    %v1535 = vpack.c.bf16 %v1525, %v1524
    %v1536 = vpack.c.bf16 %v1527, %v1526
    %v1537 = vpack.c.bf16 %v1529, %v1528
    %v1538 = vlaneseq
    %v1539 = vshrl.u32 %v1538, 7
    %v1540 = vsub.s32 0, %v1539
    %v1541 = vrot.slane %v1416, %v1540
    %v1574 = vunpack.c.l.b16 %v1384
    %v1575 = vunpack.c.l.b16 %v1385
    %v1576 = vunpack.c.l.b16 %v1386
    %v1577 = vunpack.c.l.b16 %v1387
    %v1578 = vunpack.c.l.b16 %v1388
    %v1579 = vunpack.c.l.b16 %v1389
    %v1580 = vunpack.c.l.b16 %v1390
    %v1581 = vunpack.c.l.b16 %v1391
    %v1582 = vunpack.c.l.b16 %v1392
    %v1583 = vunpack.c.l.b16 %v1393
    %v1584 = vunpack.c.l.b16 %v1394
    %v1585 = vunpack.c.l.b16 %v1395
    %v1586 = vunpack.c.l.b16 %v1396
    %v1587 = vunpack.c.l.b16 %v1397
    %v1588 = vunpack.c.l.b16 %v1398
    %v1589 = vunpack.c.l.b16 %v1399
    %v1590 = vunpack.c.l.b16 %v1400
    %v1591 = vunpack.c.l.b16 %v1401
    %v1592 = vunpack.c.l.b16 %v1402
    %v1593 = vunpack.c.l.b16 %v1403
    %v1594 = vunpack.c.l.b16 %v1404
    %v1595 = vunpack.c.l.b16 %v1405
    %v1596 = vunpack.c.l.b16 %v1406
    %v1597 = vunpack.c.l.b16 %v1407
    %v1598 = vunpack.c.l.b16 %v1408
    %v1599 = vunpack.c.l.b16 %v1409
    %v1600 = vunpack.c.l.b16 %v1410
    %v1601 = vunpack.c.l.b16 %v1411
    %v1602 = vunpack.c.l.b16 %v1412
    %v1603 = vunpack.c.l.b16 %v1413
    %v1604 = vunpack.c.l.b16 %v1414
    %v1605 = vunpack.c.l.b16 %v1415
    %v1606 = vpack.c.b16 %v1575, %v1574
    %v1607 = vpack.c.b16 %v1577, %v1576
    %v1608 = vpack.c.b16 %v1579, %v1578
    %v1609 = vpack.c.b16 %v1581, %v1580
    %v1610 = vpack.c.b16 %v1583, %v1582
    %v1611 = vpack.c.b16 %v1585, %v1584
    %v1612 = vpack.c.b16 %v1587, %v1586
    %v1613 = vpack.c.b16 %v1589, %v1588
    %v1614 = vpack.c.b16 %v1591, %v1590
    %v1615 = vpack.c.b16 %v1593, %v1592
    %v1616 = vpack.c.b16 %v1595, %v1594
    %v1617 = vpack.c.b16 %v1597, %v1596
    %v1618 = vpack.c.b16 %v1599, %v1598
    %v1619 = vpack.c.b16 %v1601, %v1600
    %v1620 = vpack.c.b16 %v1603, %v1602
    %v1621 = vpack.c.b16 %v1605, %v1604
    %1638 = vmatprep.subr.bf16.mxu0 0
    %1639 = vmatpush1.bf16.msra.mxu0 %v1613
    %1640 = vmatprep.subr.bf16.mxu0 0
    %1641 = vmatpush1.bf16.msra.mxu0 %v1612
    %1642 = vmatprep.subr.bf16.mxu0 0
    %1643 = vmatpush1.bf16.msra.mxu0 %v1611
    %1644 = vmatprep.subr.bf16.mxu0 0
    %1645 = vmatpush1.bf16.msra.mxu0 %v1610
    %1646 = vmatprep.subr.bf16.mxu0 0
    %1647 = vmatpush1.bf16.msra.mxu0 %v1609
    %1648 = vmatprep.subr.bf16.mxu0 0
    %1649 = vmatpush1.bf16.msra.mxu0 %v1608
    %1650 = vmatprep.subr.bf16.mxu0 0
    %1651 = vmatpush1.bf16.msra.mxu0 %v1607
    %1652 = vmatprep.subr.bf16.mxu0 0
    %1653 = vmatpush1.bf16.msra.mxu0 %v1606
    %1654 = vmatprep.subr.bf16.mxu0 0
    %1655 = vmatpush2.bf16.msra.mxu0 %v1621
    %1656 = vmatprep.subr.bf16.mxu0 0
    %1657 = vmatpush2.bf16.msra.mxu0 %v1620
    %1658 = vmatprep.subr.bf16.mxu0 0
    %1659 = vmatpush2.bf16.msra.mxu0 %v1619
    %1660 = vmatprep.subr.bf16.mxu0 0
    %1661 = vmatpush2.bf16.msra.mxu0 %v1618
    %1662 = vmatprep.subr.bf16.mxu0 0
    %1663 = vmatpush2.bf16.msra.mxu0 %v1617
    %1664 = vmatprep.subr.bf16.mxu0 0
    %1665 = vmatpush2.bf16.msra.mxu0 %v1616
    %1666 = vmatprep.subr.bf16.mxu0 0
    %1667 = vmatpush2.bf16.msra.mxu0 %v1615
    %1668 = vmatprep.subr.bf16.mxu0 0
    %1669 = vmatpush2.bf16.msra.mxu0 %v1614
    %1670 = vmatprep.mubr.bf16.mxu0 %v1376
    %1671 = vmatmul.mubr.bf16.gmra.mxu0 %v1530
    %v1672 = vpop.f32.mrf.mxu0
    %v1673 = vadd.f32 %v1541, %v1672
    %v1674 = vpop.f32.mrf.mxu0
    %v1675 = vpop.f32.mrf.mxu0
    %v1676 = vadd.f32 %v1541, %v1675
    %v1677 = vpop.f32.mrf.mxu0
    %1678 = vmatprep.mubr.bf16.mxu0 %v1377
    %1679 = vmatmul.mubr.bf16.gmra.mxu0 %v1531
    %v1680 = vpop.f32.mrf.mxu0
    %v1681 = vadd.f32 %v1541, %v1680
    %v1682 = vpop.f32.mrf.mxu0
    %v1683 = vpop.f32.mrf.mxu0
    %v1684 = vadd.f32 %v1541, %v1683
    %v1685 = vpop.f32.mrf.mxu0
    %1686 = vmatprep.mubr.bf16.mxu0 %v1378
    %1687 = vmatmul.mubr.bf16.gmra.mxu0 %v1532
    %v1688 = vpop.f32.mrf.mxu0
    %v1689 = vadd.f32 %v1541, %v1688
    %v1690 = vpop.f32.mrf.mxu0
    %v1691 = vpop.f32.mrf.mxu0
    %v1692 = vadd.f32 %v1541, %v1691
    %v1693 = vpop.f32.mrf.mxu0
    %1694 = vmatprep.mubr.bf16.mxu0 %v1379
    %1695 = vmatmul.mubr.bf16.gmra.mxu0 %v1533
    %v1696 = vpop.f32.mrf.mxu0
    %v1697 = vadd.f32 %v1541, %v1696
    %v1698 = vpop.f32.mrf.mxu0
    %v1699 = vpop.f32.mrf.mxu0
    %v1700 = vadd.f32 %v1541, %v1699
    %v1701 = vpop.f32.mrf.mxu0
    %1702 = vmatprep.mubr.bf16.mxu0 %v1380
    %1703 = vmatmul.mubr.bf16.gmra.mxu0 %v1534
    %v1704 = vpop.f32.mrf.mxu0
    %v1705 = vadd.f32 %v1541, %v1704
    %v1706 = vpop.f32.mrf.mxu0
    %v1707 = vpop.f32.mrf.mxu0
    %v1708 = vadd.f32 %v1541, %v1707
    %v1709 = vpop.f32.mrf.mxu0
    %1710 = vmatprep.mubr.bf16.mxu0 %v1381
    %1711 = vmatmul.mubr.bf16.gmra.mxu0 %v1535
    %v1712 = vpop.f32.mrf.mxu0
    %v1713 = vadd.f32 %v1541, %v1712
    %v1714 = vpop.f32.mrf.mxu0
    %v1715 = vpop.f32.mrf.mxu0
    %v1716 = vadd.f32 %v1541, %v1715
    %v1717 = vpop.f32.mrf.mxu0
    %1718 = vmatprep.mubr.bf16.mxu0 %v1382
    %1719 = vmatmul.mubr.bf16.gmra.mxu0 %v1536
    %v1720 = vpop.f32.mrf.mxu0
    %v1721 = vadd.f32 %v1541, %v1720
    %v1722 = vpop.f32.mrf.mxu0
    %v1723 = vpop.f32.mrf.mxu0
    %v1724 = vadd.f32 %v1541, %v1723
    %v1725 = vpop.f32.mrf.mxu0
    %1726 = vmatprep.mubr.bf16.mxu0 %v1383
    %1727 = vmatmul.mubr.bf16.gmra.mxu0 %v1537
    %v1728 = vpop.f32.mrf.mxu0
    %v1729 = vadd.f32 %v1541, %v1728
    %v1730 = vpop.f32.mrf.mxu0
    %v1731 = vpop.f32.mrf.mxu0
    %v1732 = vadd.f32 %v1541, %v1731
    %v1733 = vpop.f32.mrf.mxu0
    %1734 = vdwg.mxu0
    %v1735 = vmax.f32 %v1673, 0.0
    %v1736 = vmax.f32 %v1676, 0.0
    %v1737 = vmax.f32 %v1681, 0.0
    %v1738 = vmax.f32 %v1684, 0.0
    %v1739 = vmax.f32 %v1689, 0.0
    %v1740 = vmax.f32 %v1692, 0.0
    %v1741 = vmax.f32 %v1697, 0.0
    %v1742 = vmax.f32 %v1700, 0.0
    %v1743 = vmax.f32 %v1705, 0.0
    %v1744 = vmax.f32 %v1708, 0.0
    %v1745 = vmax.f32 %v1713, 0.0
    %v1746 = vmax.f32 %v1716, 0.0
    %v1747 = vmax.f32 %v1721, 0.0
    %v1748 = vmax.f32 %v1724, 0.0
    %v1749 = vmax.f32 %v1729, 0.0
    %v1750 = vmax.f32 %v1732, 0.0
    %v1751 = vpack.c.bf16 %v1736, %v1735
    %v1752 = vpack.c.bf16 %v1738, %v1737
    %v1753 = vpack.c.bf16 %v1740, %v1739
    %v1754 = vpack.c.bf16 %v1742, %v1741
    %v1755 = vpack.c.bf16 %v1744, %v1743
    %v1756 = vpack.c.bf16 %v1746, %v1745
    %v1757 = vpack.c.bf16 %v1748, %v1747
    %v1758 = vpack.c.bf16 %v1750, %v1749
    %v1759 = vld [vmem:[#allocation2 + $0x200] sm:$0xf]
    %v1760 = vld [vmem:[#allocation2 + $0x204] sm:$0xf]
    %v1761 = vld [vmem:[#allocation2 + $0x208] sm:$0xf]
    %v1762 = vld [vmem:[#allocation2 + $0x20c] sm:$0xf]
    %v1763 = vld [vmem:[#allocation2 + $0x210] sm:$0xf]
    %v1764 = vld [vmem:[#allocation2 + $0x214] sm:$0xf]
    %v1765 = vld [vmem:[#allocation2 + $0x218] sm:$0xf]
    %v1766 = vld [vmem:[#allocation2 + $0x21c] sm:$0xf]
    %v1767 = vld [vmem:[#allocation2 + $0x220] sm:$0xf]
    %v1768 = vld [vmem:[#allocation2 + $0x224] sm:$0xf]
    %v1769 = vld [vmem:[#allocation2 + $0x228] sm:$0xf]
    %v1770 = vld [vmem:[#allocation2 + $0x22c] sm:$0xf]
    %v1771 = vld [vmem:[#allocation2 + $0x230] sm:$0xf]
    %v1772 = vld [vmem:[#allocation2 + $0x234] sm:$0xf]
    %v1773 = vld [vmem:[#allocation2 + $0x238] sm:$0xf]
    %v1774 = vld [vmem:[#allocation2 + $0x23c] sm:$0xf]
    %v1775 = vld [vmem:[#allocation2 + $0x240] sm:$0xf]
    %v1776 = vld [vmem:[#allocation2 + $0x244] sm:$0xf]
    %v1777 = vld [vmem:[#allocation2 + $0x248] sm:$0xf]
    %v1778 = vld [vmem:[#allocation2 + $0x24c] sm:$0xf]
    %v1779 = vld [vmem:[#allocation2 + $0x250] sm:$0xf]
    %v1780 = vld [vmem:[#allocation2 + $0x254] sm:$0xf]
    %v1781 = vld [vmem:[#allocation2 + $0x258] sm:$0xf]
    %v1782 = vld [vmem:[#allocation2 + $0x25c] sm:$0xf]
    %v1783 = vld [vmem:[#allocation2 + $0x260] sm:$0xf]
    %v1784 = vld [vmem:[#allocation2 + $0x264] sm:$0xf]
    %v1785 = vld [vmem:[#allocation2 + $0x268] sm:$0xf]
    %v1786 = vld [vmem:[#allocation2 + $0x26c] sm:$0xf]
    %v1787 = vld [vmem:[#allocation2 + $0x270] sm:$0xf]
    %v1788 = vld [vmem:[#allocation2 + $0x274] sm:$0xf]
    %v1789 = vld [vmem:[#allocation2 + $0x278] sm:$0xf]
    %v1790 = vld [vmem:[#allocation2 + $0x27c] sm:$0xf]
    %v1791 = vld [vmem:[#allocation2 + $0x280] sm:$0xf]
    %v1792 = vld [vmem:[#allocation2 + $0x284] sm:$0xf]
    %v1793 = vld [vmem:[#allocation2 + $0x288] sm:$0xf]
    %v1794 = vld [vmem:[#allocation2 + $0x28c] sm:$0xf]
    %v1795 = vld [vmem:[#allocation2 + $0x290] sm:$0xf]
    %v1796 = vld [vmem:[#allocation2 + $0x294] sm:$0xf]
    %v1797 = vld [vmem:[#allocation2 + $0x298] sm:$0xf]
    %v1798 = vld [vmem:[#allocation2 + $0x29c] sm:$0xf]
    %v1799 = vld [vmem:[#allocation2 + $0x2a0] sm:$0xf]
    %v1800 = vld [vmem:[#allocation2 + $0x2a4] sm:$0xf]
    %v1801 = vld [vmem:[#allocation2 + $0x2a8] sm:$0xf]
    %v1802 = vld [vmem:[#allocation2 + $0x2ac] sm:$0xf]
    %v1803 = vld [vmem:[#allocation2 + $0x2b0] sm:$0xf]
    %v1804 = vld [vmem:[#allocation2 + $0x2b4] sm:$0xf]
    %v1805 = vld [vmem:[#allocation2 + $0x2b8] sm:$0xf]
    %v1806 = vld [vmem:[#allocation2 + $0x2bc] sm:$0xf]
    %v1807 = vld [vmem:[%s4 + $0x4] sm:$0x1]
    %v1808 = vld [vmem:[%s4 + $0x5] sm:$0x1]
    %v1809 = vld [vmem:[%s4 + $0x6] sm:$0x1]
    %v1810 = vlaneseq
    %v1811 = vshrl.u32 %v1810, 7
    %v1812 = vsub.s32 0, %v1811
    %v1813 = vrot.slane %v1807, %v1812
    %v1830 = vunpack.c.l.b16 %v1759
    %v1831 = vunpack.c.l.b16 %v1760
    %v1832 = vunpack.c.l.b16 %v1761
    %v1833 = vunpack.c.l.b16 %v1762
    %v1834 = vunpack.c.l.b16 %v1763
    %v1835 = vunpack.c.l.b16 %v1764
    %v1836 = vunpack.c.l.b16 %v1765
    %v1837 = vunpack.c.l.b16 %v1766
    %v1838 = vunpack.c.l.b16 %v1767
    %v1839 = vunpack.c.l.b16 %v1768
    %v1840 = vunpack.c.l.b16 %v1769
    %v1841 = vunpack.c.l.b16 %v1770
    %v1842 = vunpack.c.l.b16 %v1771
    %v1843 = vunpack.c.l.b16 %v1772
    %v1844 = vunpack.c.l.b16 %v1773
    %v1845 = vunpack.c.l.b16 %v1774
    %v1846 = vpack.c.b16 %v1831, %v1830
    %v1847 = vpack.c.b16 %v1833, %v1832
    %v1848 = vpack.c.b16 %v1835, %v1834
    %v1849 = vpack.c.b16 %v1837, %v1836
    %v1850 = vpack.c.b16 %v1839, %v1838
    %v1851 = vpack.c.b16 %v1841, %v1840
    %v1852 = vpack.c.b16 %v1843, %v1842
    %v1853 = vpack.c.b16 %v1845, %v1844
    %1862 = vmatprep.subr.bf16.mxu0 0
    %1863 = vmatpush1.bf16.msra.mxu0 %v1853
    %1864 = vmatprep.subr.bf16.mxu0 0
    %1865 = vmatpush1.bf16.msra.mxu0 %v1852
    %1866 = vmatprep.subr.bf16.mxu0 0
    %1867 = vmatpush1.bf16.msra.mxu0 %v1851
    %1868 = vmatprep.subr.bf16.mxu0 0
    %1869 = vmatpush1.bf16.msra.mxu0 %v1850
    %1870 = vmatprep.subr.bf16.mxu0 0
    %1871 = vmatpush1.bf16.msra.mxu0 %v1849
    %1872 = vmatprep.subr.bf16.mxu0 0
    %1873 = vmatpush1.bf16.msra.mxu0 %v1848
    %1874 = vmatprep.subr.bf16.mxu0 0
    %1875 = vmatpush1.bf16.msra.mxu0 %v1847
    %1876 = vmatprep.subr.bf16.mxu0 0
    %1877 = vmatpush1.bf16.msra.mxu0 %v1846
    %1878 = vmatprep.subr.bf16.mxu0 0
    %1879 = vmatpush2.bf16.msra.mxu0 0
    %1880 = vmatprep.subr.bf16.mxu0 0
    %1881 = vmatpush2.bf16.msra.mxu0 0
    %1882 = vmatprep.subr.bf16.mxu0 0
    %1883 = vmatpush2.bf16.msra.mxu0 0
    %1884 = vmatprep.subr.bf16.mxu0 0
    %1885 = vmatpush2.bf16.msra.mxu0 0
    %1886 = vmatprep.subr.bf16.mxu0 0
    %1887 = vmatpush2.bf16.msra.mxu0 0
    %1888 = vmatprep.subr.bf16.mxu0 0
    %1889 = vmatpush2.bf16.msra.mxu0 0
    %1890 = vmatprep.subr.bf16.mxu0 0
    %1891 = vmatpush2.bf16.msra.mxu0 0
    %1892 = vmatprep.subr.bf16.mxu0 0
    %1893 = vmatpush2.bf16.msra.mxu0 0
    %1894 = vmatprep.mubr.bf16.mxu0 0
    %1895 = vmatmul.mubr.bf16.gmra.mxu0 %v1751
    %v1896 = vpop.f32.mrf.mxu0
    %v1897 = vadd.f32 %v1813, %v1896
    %v1898 = vpop.f32.mrf.mxu0
    %v1899 = vpop.f32.mrf.mxu0
    %v1900 = vadd.f32 %v1813, %v1899
    %v1901 = vpop.f32.mrf.mxu0
    %1902 = vmatprep.mubr.bf16.mxu0 0
    %1903 = vmatmul.mubr.bf16.gmra.mxu0 %v1752
    %v1904 = vpop.f32.mrf.mxu0
    %v1905 = vadd.f32 %v1813, %v1904
    %v1906 = vpop.f32.mrf.mxu0
    %v1907 = vpop.f32.mrf.mxu0
    %v1908 = vadd.f32 %v1813, %v1907
    %v1909 = vpop.f32.mrf.mxu0
    %1910 = vmatprep.mubr.bf16.mxu0 0
    %1911 = vmatmul.mubr.bf16.gmra.mxu0 %v1753
    %v1912 = vpop.f32.mrf.mxu0
    %v1913 = vadd.f32 %v1813, %v1912
    %v1914 = vpop.f32.mrf.mxu0
    %v1915 = vpop.f32.mrf.mxu0
    %v1916 = vadd.f32 %v1813, %v1915
    %v1917 = vpop.f32.mrf.mxu0
    %1918 = vmatprep.mubr.bf16.mxu0 0
    %1919 = vmatmul.mubr.bf16.gmra.mxu0 %v1754
    %v1920 = vpop.f32.mrf.mxu0
    %v1921 = vadd.f32 %v1813, %v1920
    %v1922 = vpop.f32.mrf.mxu0
    %v1923 = vpop.f32.mrf.mxu0
    %v1924 = vadd.f32 %v1813, %v1923
    %v1925 = vpop.f32.mrf.mxu0
    %1926 = vmatprep.mubr.bf16.mxu0 0
    %1927 = vmatmul.mubr.bf16.gmra.mxu0 %v1755
    %v1928 = vpop.f32.mrf.mxu0
    %v1929 = vadd.f32 %v1813, %v1928
    %v1930 = vpop.f32.mrf.mxu0
    %v1931 = vpop.f32.mrf.mxu0
    %v1932 = vadd.f32 %v1813, %v1931
    %v1933 = vpop.f32.mrf.mxu0
    %1934 = vmatprep.mubr.bf16.mxu0 0
    %1935 = vmatmul.mubr.bf16.gmra.mxu0 %v1756
    %v1936 = vpop.f32.mrf.mxu0
    %v1937 = vadd.f32 %v1813, %v1936
    %v1938 = vpop.f32.mrf.mxu0
    %v1939 = vpop.f32.mrf.mxu0
    %v1940 = vadd.f32 %v1813, %v1939
    %v1941 = vpop.f32.mrf.mxu0
    %1942 = vmatprep.mubr.bf16.mxu0 0
    %1943 = vmatmul.mubr.bf16.gmra.mxu0 %v1757
    %v1944 = vpop.f32.mrf.mxu0
    %v1945 = vadd.f32 %v1813, %v1944
    %v1946 = vpop.f32.mrf.mxu0
    %v1947 = vpop.f32.mrf.mxu0
    %v1948 = vadd.f32 %v1813, %v1947
    %v1949 = vpop.f32.mrf.mxu0
    %1950 = vmatprep.mubr.bf16.mxu0 0
    %1951 = vmatmul.mubr.bf16.gmra.mxu0 %v1758
    %v1952 = vpop.f32.mrf.mxu0
    %v1953 = vadd.f32 %v1813, %v1952
    %v1954 = vpop.f32.mrf.mxu0
    %v1955 = vpop.f32.mrf.mxu0
    %v1956 = vadd.f32 %v1813, %v1955
    %v1957 = vpop.f32.mrf.mxu0
    %1958 = vdwg.mxu0
    %v1959 = vmax.f32 %v1897, 0.0
    %v1960 = vmax.f32 %v1900, 0.0
    %v1961 = vmax.f32 %v1905, 0.0
    %v1962 = vmax.f32 %v1908, 0.0
    %v1963 = vmax.f32 %v1913, 0.0
    %v1964 = vmax.f32 %v1916, 0.0
    %v1965 = vmax.f32 %v1921, 0.0
    %v1966 = vmax.f32 %v1924, 0.0
    %v1967 = vmax.f32 %v1929, 0.0
    %v1968 = vmax.f32 %v1932, 0.0
    %v1969 = vmax.f32 %v1937, 0.0
    %v1970 = vmax.f32 %v1940, 0.0
    %v1971 = vmax.f32 %v1945, 0.0
    %v1972 = vmax.f32 %v1948, 0.0
    %v1973 = vmax.f32 %v1953, 0.0
    %v1974 = vmax.f32 %v1956, 0.0
    %v1975 = vpack.c.bf16 %v1960, %v1959
    %v1976 = vpack.c.bf16 %v1962, %v1961
    %v1977 = vpack.c.bf16 %v1964, %v1963
    %v1978 = vpack.c.bf16 %v1966, %v1965
    %v1979 = vpack.c.bf16 %v1968, %v1967
    %v1980 = vpack.c.bf16 %v1970, %v1969
    %v1981 = vpack.c.bf16 %v1972, %v1971
    %v1982 = vpack.c.bf16 %v1974, %v1973
    %v1983 = vlaneseq
    %v1984 = vshrl.u32 %v1983, 7
    %v1985 = vsub.s32 0, %v1984
    %v1986 = vrot.slane %v1808, %v1985
    %v2003 = vunpack.c.l.b16 %v1775
    %v2004 = vunpack.c.l.b16 %v1776
    %v2005 = vunpack.c.l.b16 %v1777
    %v2006 = vunpack.c.l.b16 %v1778
    %v2007 = vunpack.c.l.b16 %v1779
    %v2008 = vunpack.c.l.b16 %v1780
    %v2009 = vunpack.c.l.b16 %v1781
    %v2010 = vunpack.c.l.b16 %v1782
    %v2011 = vunpack.c.l.b16 %v1783
    %v2012 = vunpack.c.l.b16 %v1784
    %v2013 = vunpack.c.l.b16 %v1785
    %v2014 = vunpack.c.l.b16 %v1786
    %v2015 = vunpack.c.l.b16 %v1787
    %v2016 = vunpack.c.l.b16 %v1788
    %v2017 = vunpack.c.l.b16 %v1789
    %v2018 = vunpack.c.l.b16 %v1790
    %v2019 = vpack.c.b16 %v2004, %v2003
    %v2020 = vpack.c.b16 %v2006, %v2005
    %v2021 = vpack.c.b16 %v2008, %v2007
    %v2022 = vpack.c.b16 %v2010, %v2009
    %v2023 = vpack.c.b16 %v2012, %v2011
    %v2024 = vpack.c.b16 %v2014, %v2013
    %v2025 = vpack.c.b16 %v2016, %v2015
    %v2026 = vpack.c.b16 %v2018, %v2017
    %2035 = vmatprep.subr.bf16.mxu0 0
    %2036 = vmatpush1.bf16.msra.mxu0 %v2026
    %2037 = vmatprep.subr.bf16.mxu0 0
    %2038 = vmatpush1.bf16.msra.mxu0 %v2025
    %2039 = vmatprep.subr.bf16.mxu0 0
    %2040 = vmatpush1.bf16.msra.mxu0 %v2024
    %2041 = vmatprep.subr.bf16.mxu0 0
    %2042 = vmatpush1.bf16.msra.mxu0 %v2023
    %2043 = vmatprep.subr.bf16.mxu0 0
    %2044 = vmatpush1.bf16.msra.mxu0 %v2022
    %2045 = vmatprep.subr.bf16.mxu0 0
    %2046 = vmatpush1.bf16.msra.mxu0 %v2021
    %2047 = vmatprep.subr.bf16.mxu0 0
    %2048 = vmatpush1.bf16.msra.mxu0 %v2020
    %2049 = vmatprep.subr.bf16.mxu0 0
    %2050 = vmatpush1.bf16.msra.mxu0 %v2019
    %2051 = vmatprep.subr.bf16.mxu0 0
    %2052 = vmatpush2.bf16.msra.mxu0 0
    %2053 = vmatprep.subr.bf16.mxu0 0
    %2054 = vmatpush2.bf16.msra.mxu0 0
    %2055 = vmatprep.subr.bf16.mxu0 0
    %2056 = vmatpush2.bf16.msra.mxu0 0
    %2057 = vmatprep.subr.bf16.mxu0 0
    %2058 = vmatpush2.bf16.msra.mxu0 0
    %2059 = vmatprep.subr.bf16.mxu0 0
    %2060 = vmatpush2.bf16.msra.mxu0 0
    %2061 = vmatprep.subr.bf16.mxu0 0
    %2062 = vmatpush2.bf16.msra.mxu0 0
    %2063 = vmatprep.subr.bf16.mxu0 0
    %2064 = vmatpush2.bf16.msra.mxu0 0
    %2065 = vmatprep.subr.bf16.mxu0 0
    %2066 = vmatpush2.bf16.msra.mxu0 0
    %2067 = vmatprep.mubr.bf16.mxu0 0
    %2068 = vmatmul.mubr.bf16.gmra.mxu0 %v1975
    %v2069 = vpop.f32.mrf.mxu0
    %v2070 = vadd.f32 %v1986, %v2069
    %v2071 = vpop.f32.mrf.mxu0
    %v2072 = vpop.f32.mrf.mxu0
    %v2073 = vadd.f32 %v1986, %v2072
    %v2074 = vpop.f32.mrf.mxu0
    %2075 = vmatprep.mubr.bf16.mxu0 0
    %2076 = vmatmul.mubr.bf16.gmra.mxu0 %v1976
    %v2077 = vpop.f32.mrf.mxu0
    %v2078 = vadd.f32 %v1986, %v2077
    %v2079 = vpop.f32.mrf.mxu0
    %v2080 = vpop.f32.mrf.mxu0
    %v2081 = vadd.f32 %v1986, %v2080
    %v2082 = vpop.f32.mrf.mxu0
    %2083 = vmatprep.mubr.bf16.mxu0 0
    %2084 = vmatmul.mubr.bf16.gmra.mxu0 %v1977
    %v2085 = vpop.f32.mrf.mxu0
    %v2086 = vadd.f32 %v1986, %v2085
    %v2087 = vpop.f32.mrf.mxu0
    %v2088 = vpop.f32.mrf.mxu0
    %v2089 = vadd.f32 %v1986, %v2088
    %v2090 = vpop.f32.mrf.mxu0
    %2091 = vmatprep.mubr.bf16.mxu0 0
    %2092 = vmatmul.mubr.bf16.gmra.mxu0 %v1978
    %v2093 = vpop.f32.mrf.mxu0
    %v2094 = vadd.f32 %v1986, %v2093
    %v2095 = vpop.f32.mrf.mxu0
    %v2096 = vpop.f32.mrf.mxu0
    %v2097 = vadd.f32 %v1986, %v2096
    %v2098 = vpop.f32.mrf.mxu0
    %2099 = vmatprep.mubr.bf16.mxu0 0
    %2100 = vmatmul.mubr.bf16.gmra.mxu0 %v1979
    %v2101 = vpop.f32.mrf.mxu0
    %v2102 = vadd.f32 %v1986, %v2101
    %v2103 = vpop.f32.mrf.mxu0
    %v2104 = vpop.f32.mrf.mxu0
    %v2105 = vadd.f32 %v1986, %v2104
    %v2106 = vpop.f32.mrf.mxu0
    %2107 = vmatprep.mubr.bf16.mxu0 0
    %2108 = vmatmul.mubr.bf16.gmra.mxu0 %v1980
    %v2109 = vpop.f32.mrf.mxu0
    %v2110 = vadd.f32 %v1986, %v2109
    %v2111 = vpop.f32.mrf.mxu0
    %v2112 = vpop.f32.mrf.mxu0
    %v2113 = vadd.f32 %v1986, %v2112
    %v2114 = vpop.f32.mrf.mxu0
    %2115 = vmatprep.mubr.bf16.mxu0 0
    %2116 = vmatmul.mubr.bf16.gmra.mxu0 %v1981
    %v2117 = vpop.f32.mrf.mxu0
    %v2118 = vadd.f32 %v1986, %v2117
    %v2119 = vpop.f32.mrf.mxu0
    %v2120 = vpop.f32.mrf.mxu0
    %v2121 = vadd.f32 %v1986, %v2120
    %v2122 = vpop.f32.mrf.mxu0
    %2123 = vmatprep.mubr.bf16.mxu0 0
    %2124 = vmatmul.mubr.bf16.gmra.mxu0 %v1982
    %v2125 = vpop.f32.mrf.mxu0
    %v2126 = vadd.f32 %v1986, %v2125
    %v2127 = vpop.f32.mrf.mxu0
    %v2128 = vpop.f32.mrf.mxu0
    %v2129 = vadd.f32 %v1986, %v2128
    %v2130 = vpop.f32.mrf.mxu0
    %2131 = vdwg.mxu0
    %v2132 = vpack.c.bf16 %v2073, %v2070
    %v2133 = vpack.c.bf16 %v2081, %v2078
    %v2134 = vpack.c.bf16 %v2089, %v2086
    %v2135 = vpack.c.bf16 %v2097, %v2094
    %v2136 = vpack.c.bf16 %v2105, %v2102
    %v2137 = vpack.c.bf16 %v2113, %v2110
    %v2138 = vpack.c.bf16 %v2121, %v2118
    %v2139 = vpack.c.bf16 %v2129, %v2126
    %v2140 = vlaneseq
    %v2141 = vshrl.u32 %v2140, 7
    %v2142 = vsub.s32 0, %v2141
    %v2143 = vrot.slane %v1809, %v2142
    %v2160 = vunpack.c.l.b16 %v1791
    %v2161 = vunpack.c.l.b16 %v1792
    %v2162 = vunpack.c.l.b16 %v1793
    %v2163 = vunpack.c.l.b16 %v1794
    %v2164 = vunpack.c.l.b16 %v1795
    %v2165 = vunpack.c.l.b16 %v1796
    %v2166 = vunpack.c.l.b16 %v1797
    %v2167 = vunpack.c.l.b16 %v1798
    %v2168 = vunpack.c.l.b16 %v1799
    %v2169 = vunpack.c.l.b16 %v1800
    %v2170 = vunpack.c.l.b16 %v1801
    %v2171 = vunpack.c.l.b16 %v1802
    %v2172 = vunpack.c.l.b16 %v1803
    %v2173 = vunpack.c.l.b16 %v1804
    %v2174 = vunpack.c.l.b16 %v1805
    %v2175 = vunpack.c.l.b16 %v1806
    %v2176 = vpack.c.b16 %v2161, %v2160
    %v2177 = vpack.c.b16 %v2163, %v2162
    %v2178 = vpack.c.b16 %v2165, %v2164
    %v2179 = vpack.c.b16 %v2167, %v2166
    %v2180 = vpack.c.b16 %v2169, %v2168
    %v2181 = vpack.c.b16 %v2171, %v2170
    %v2182 = vpack.c.b16 %v2173, %v2172
    %v2183 = vpack.c.b16 %v2175, %v2174
    %2192 = vmatprep.subr.bf16.mxu0 0
    %2193 = vmatpush1.bf16.msra.mxu0 %v2183
    %2194 = vmatprep.subr.bf16.mxu0 0
    %2195 = vmatpush1.bf16.msra.mxu0 %v2182
    %2196 = vmatprep.subr.bf16.mxu0 0
    %2197 = vmatpush1.bf16.msra.mxu0 %v2181
    %2198 = vmatprep.subr.bf16.mxu0 0
    %2199 = vmatpush1.bf16.msra.mxu0 %v2180
    %2200 = vmatprep.subr.bf16.mxu0 0
    %2201 = vmatpush1.bf16.msra.mxu0 %v2179
    %2202 = vmatprep.subr.bf16.mxu0 0
    %2203 = vmatpush1.bf16.msra.mxu0 %v2178
    %2204 = vmatprep.subr.bf16.mxu0 0
    %2205 = vmatpush1.bf16.msra.mxu0 %v2177
    %2206 = vmatprep.subr.bf16.mxu0 0
    %2207 = vmatpush1.bf16.msra.mxu0 %v2176
    %2208 = vmatprep.subr.bf16.mxu0 0
    %2209 = vmatpush2.bf16.msra.mxu0 0
    %2210 = vmatprep.subr.bf16.mxu0 0
    %2211 = vmatpush2.bf16.msra.mxu0 0
    %2212 = vmatprep.subr.bf16.mxu0 0
    %2213 = vmatpush2.bf16.msra.mxu0 0
    %2214 = vmatprep.subr.bf16.mxu0 0
    %2215 = vmatpush2.bf16.msra.mxu0 0
    %2216 = vmatprep.subr.bf16.mxu0 0
    %2217 = vmatpush2.bf16.msra.mxu0 0
    %2218 = vmatprep.subr.bf16.mxu0 0
    %2219 = vmatpush2.bf16.msra.mxu0 0
    %2220 = vmatprep.subr.bf16.mxu0 0
    %2221 = vmatpush2.bf16.msra.mxu0 0
    %2222 = vmatprep.subr.bf16.mxu0 0
    %2223 = vmatpush2.bf16.msra.mxu0 0
    %2224 = vmatprep.mubr.bf16.mxu0 0
    %2225 = vmatmul.mubr.bf16.gmra.mxu0 %v2132
    %v2226 = vpop.f32.mrf.mxu0
    %v2227 = vadd.f32 %v2143, %v2226
    %v2228 = vpop.f32.mrf.mxu0
    %v2229 = vpop.f32.mrf.mxu0
    %v2230 = vadd.f32 %v2143, %v2229
    %v2231 = vpop.f32.mrf.mxu0
    %2232 = vmatprep.mubr.bf16.mxu0 0
    %2233 = vmatmul.mubr.bf16.gmra.mxu0 %v2133
    %v2234 = vpop.f32.mrf.mxu0
    %v2235 = vadd.f32 %v2143, %v2234
    %v2236 = vpop.f32.mrf.mxu0
    %v2237 = vpop.f32.mrf.mxu0
    %v2238 = vadd.f32 %v2143, %v2237
    %v2239 = vpop.f32.mrf.mxu0
    %2240 = vmatprep.mubr.bf16.mxu0 0
    %2241 = vmatmul.mubr.bf16.gmra.mxu0 %v2134
    %v2242 = vpop.f32.mrf.mxu0
    %v2243 = vadd.f32 %v2143, %v2242
    %v2244 = vpop.f32.mrf.mxu0
    %v2245 = vpop.f32.mrf.mxu0
    %v2246 = vadd.f32 %v2143, %v2245
    %v2247 = vpop.f32.mrf.mxu0
    %2248 = vmatprep.mubr.bf16.mxu0 0
    %2249 = vmatmul.mubr.bf16.gmra.mxu0 %v2135
    %v2250 = vpop.f32.mrf.mxu0
    %v2251 = vadd.f32 %v2143, %v2250
    %v2252 = vpop.f32.mrf.mxu0
    %v2253 = vpop.f32.mrf.mxu0
    %v2254 = vadd.f32 %v2143, %v2253
    %v2255 = vpop.f32.mrf.mxu0
    %2256 = vmatprep.mubr.bf16.mxu0 0
    %2257 = vmatmul.mubr.bf16.gmra.mxu0 %v2136
    %v2258 = vpop.f32.mrf.mxu0
    %v2259 = vadd.f32 %v2143, %v2258
    %v2260 = vpop.f32.mrf.mxu0
    %v2261 = vpop.f32.mrf.mxu0
    %v2262 = vadd.f32 %v2143, %v2261
    %v2263 = vpop.f32.mrf.mxu0
    %2264 = vmatprep.mubr.bf16.mxu0 0
    %2265 = vmatmul.mubr.bf16.gmra.mxu0 %v2137
    %v2266 = vpop.f32.mrf.mxu0
    %v2267 = vadd.f32 %v2143, %v2266
    %v2268 = vpop.f32.mrf.mxu0
    %v2269 = vpop.f32.mrf.mxu0
    %v2270 = vadd.f32 %v2143, %v2269
    %v2271 = vpop.f32.mrf.mxu0
    %2272 = vmatprep.mubr.bf16.mxu0 0
    %2273 = vmatmul.mubr.bf16.gmra.mxu0 %v2138
    %v2274 = vpop.f32.mrf.mxu0
    %v2275 = vadd.f32 %v2143, %v2274
    %v2276 = vpop.f32.mrf.mxu0
    %v2277 = vpop.f32.mrf.mxu0
    %v2278 = vadd.f32 %v2143, %v2277
    %v2279 = vpop.f32.mrf.mxu0
    %2280 = vmatprep.mubr.bf16.mxu0 0
    %2281 = vmatmul.mubr.bf16.gmra.mxu0 %v2139
    %v2282 = vpop.f32.mrf.mxu0
    %v2283 = vadd.f32 %v2143, %v2282
    %v2284 = vpop.f32.mrf.mxu0
    %v2285 = vpop.f32.mrf.mxu0
    %v2286 = vadd.f32 %v2143, %v2285
    %v2287 = vpop.f32.mrf.mxu0
    %2288 = vdwg.mxu0
    %2289 = vmax.xlane.f32.xlu0 %v2227
    %v2290 = vpop.xlane.xlu0 %2289
    %2291 = vmax.xlane.f32.xlu0 %v2230
    %v2292 = vpop.xlane.xlu0 %2291
    %2293 = vmax.xlane.f32.xlu0 %v2235
    %v2294 = vpop.xlane.xlu0 %2293
    %2295 = vmax.xlane.f32.xlu0 %v2238
    %v2296 = vpop.xlane.xlu0 %2295
    %2297 = vmax.xlane.f32.xlu0 %v2243
    %v2298 = vpop.xlane.xlu0 %2297
    %2299 = vmax.xlane.f32.xlu0 %v2246
    %v2300 = vpop.xlane.xlu0 %2299
    %2301 = vmax.xlane.f32.xlu0 %v2251
    %v2302 = vpop.xlane.xlu0 %2301
    %2303 = vmax.xlane.f32.xlu0 %v2254
    %v2304 = vpop.xlane.xlu0 %2303
    %2305 = vmax.xlane.f32.xlu0 %v2259
    %v2306 = vpop.xlane.xlu0 %2305
    %2307 = vmax.xlane.f32.xlu0 %v2262
    %v2308 = vpop.xlane.xlu0 %2307
    %2309 = vmax.xlane.f32.xlu0 %v2267
    %v2310 = vpop.xlane.xlu0 %2309
    %2311 = vmax.xlane.f32.xlu0 %v2270
    %v2312 = vpop.xlane.xlu0 %2311
    %2313 = vmax.xlane.f32.xlu0 %v2275
    %v2314 = vpop.xlane.xlu0 %2313
    %2315 = vmax.xlane.f32.xlu0 %v2278
    %v2316 = vpop.xlane.xlu0 %2315
    %2317 = vmax.xlane.f32.xlu0 %v2283
    %v2318 = vpop.xlane.xlu0 %2317
    %2319 = vmax.xlane.f32.xlu0 %v2286
    %v2320 = vpop.xlane.xlu0 %2319
    %v2321 = vsub.f32 %v2227, %v2290
    %v2322 = vsub.f32 %v2230, %v2292
    %v2323 = vsub.f32 %v2235, %v2294
    %v2324 = vsub.f32 %v2238, %v2296
    %v2325 = vsub.f32 %v2243, %v2298
    %v2326 = vsub.f32 %v2246, %v2300
    %v2327 = vsub.f32 %v2251, %v2302
    %v2328 = vsub.f32 %v2254, %v2304
    %v2329 = vsub.f32 %v2259, %v2306
    %v2330 = vsub.f32 %v2262, %v2308
    %v2331 = vsub.f32 %v2267, %v2310
    %v2332 = vsub.f32 %v2270, %v2312
    %v2333 = vsub.f32 %v2275, %v2314
    %v2334 = vsub.f32 %v2278, %v2316
    %v2335 = vsub.f32 %v2283, %v2318
    %v2336 = vsub.f32 %v2286, %v2320
    %v2337 = vmul.f32 %v2321, 1.442695
    %v2338 = vpow.pop %v2337
    %v2339 = vmul.f32 %v2322, 1.442695
    %v2340 = vpow.pop %v2339
    %v2341 = vmul.f32 %v2323, 1.442695
    %v2342 = vpow.pop %v2341
    %v2343 = vmul.f32 %v2324, 1.442695
    %v2344 = vpow.pop %v2343
    %v2345 = vmul.f32 %v2325, 1.442695
    %v2346 = vpow.pop %v2345
    %v2347 = vmul.f32 %v2326, 1.442695
    %v2348 = vpow.pop %v2347
    %v2349 = vmul.f32 %v2327, 1.442695
    %v2350 = vpow.pop %v2349
    %v2351 = vmul.f32 %v2328, 1.442695
    %v2352 = vpow.pop %v2351
    %v2353 = vmul.f32 %v2329, 1.442695
    %v2354 = vpow.pop %v2353
    %v2355 = vmul.f32 %v2330, 1.442695
    %v2356 = vpow.pop %v2355
    %v2357 = vmul.f32 %v2331, 1.442695
    %v2358 = vpow.pop %v2357
    %v2359 = vmul.f32 %v2332, 1.442695
    %v2360 = vpow.pop %v2359
    %v2361 = vmul.f32 %v2333, 1.442695
    %v2362 = vpow.pop %v2361
    %v2363 = vmul.f32 %v2334, 1.442695
    %v2364 = vpow.pop %v2363
    %v2365 = vmul.f32 %v2335, 1.442695
    %v2366 = vpow.pop %v2365
    %v2367 = vmul.f32 %v2336, 1.442695
    %v2368 = vpow.pop %v2367
    %2369 = vadd.xlane.f32.xlu0 %v2338
    %v2370 = vpop.xlane.xlu0 %2369
    %2371 = vadd.xlane.f32.xlu0 %v2340
    %v2372 = vpop.xlane.xlu0 %2371
    %2373 = vadd.xlane.f32.xlu0 %v2342
    %v2374 = vpop.xlane.xlu0 %2373
    %2375 = vadd.xlane.f32.xlu0 %v2344
    %v2376 = vpop.xlane.xlu0 %2375
    %2377 = vadd.xlane.f32.xlu0 %v2346
    %v2378 = vpop.xlane.xlu0 %2377
    %2379 = vadd.xlane.f32.xlu0 %v2348
    %v2380 = vpop.xlane.xlu0 %2379
    %2381 = vadd.xlane.f32.xlu0 %v2350
    %v2382 = vpop.xlane.xlu0 %2381
    %2383 = vadd.xlane.f32.xlu0 %v2352
    %v2384 = vpop.xlane.xlu0 %2383
    %2385 = vadd.xlane.f32.xlu0 %v2354
    %v2386 = vpop.xlane.xlu0 %2385
    %2387 = vadd.xlane.f32.xlu0 %v2356
    %v2388 = vpop.xlane.xlu0 %2387
    %2389 = vadd.xlane.f32.xlu0 %v2358
    %v2390 = vpop.xlane.xlu0 %2389
    %2391 = vadd.xlane.f32.xlu0 %v2360
    %v2392 = vpop.xlane.xlu0 %2391
    %2393 = vadd.xlane.f32.xlu0 %v2362
    %v2394 = vpop.xlane.xlu0 %2393
    %2395 = vadd.xlane.f32.xlu0 %v2364
    %v2396 = vpop.xlane.xlu0 %2395
    %2397 = vadd.xlane.f32.xlu0 %v2366
    %v2398 = vpop.xlane.xlu0 %2397
    %2399 = vadd.xlane.f32.xlu0 %v2368
    %v2400 = vpop.xlane.xlu0 %2399
    %v2401 = vlog2.pop %v2370
    %v2402 = vmul.f32 %v2401, 0.6931472
    %v2403 = vlog2.pop %v2372
    %v2404 = vmul.f32 %v2403, 0.6931472
    %v2405 = vlog2.pop %v2374
    %v2406 = vmul.f32 %v2405, 0.6931472
    %v2407 = vlog2.pop %v2376
    %v2408 = vmul.f32 %v2407, 0.6931472
    %v2409 = vlog2.pop %v2378
    %v2410 = vmul.f32 %v2409, 0.6931472
    %v2411 = vlog2.pop %v2380
    %v2412 = vmul.f32 %v2411, 0.6931472
    %v2413 = vlog2.pop %v2382
    %v2414 = vmul.f32 %v2413, 0.6931472
    %v2415 = vlog2.pop %v2384
    %v2416 = vmul.f32 %v2415, 0.6931472
    %v2417 = vlog2.pop %v2386
    %v2418 = vmul.f32 %v2417, 0.6931472
    %v2419 = vlog2.pop %v2388
    %v2420 = vmul.f32 %v2419, 0.6931472
    %v2421 = vlog2.pop %v2390
    %v2422 = vmul.f32 %v2421, 0.6931472
    %v2423 = vlog2.pop %v2392
    %v2424 = vmul.f32 %v2423, 0.6931472
    %v2425 = vlog2.pop %v2394
    %v2426 = vmul.f32 %v2425, 0.6931472
    %v2427 = vlog2.pop %v2396
    %v2428 = vmul.f32 %v2427, 0.6931472
    %v2429 = vlog2.pop %v2398
    %v2430 = vmul.f32 %v2429, 0.6931472
    %v2431 = vlog2.pop %v2400
    %v2432 = vmul.f32 %v2431, 0.6931472
    %v2433 = vsub.f32 %v2321, %v2402
    %v2434 = vsub.f32 %v2322, %v2404
    %v2435 = vsub.f32 %v2323, %v2406
    %v2436 = vsub.f32 %v2324, %v2408
    %v2437 = vsub.f32 %v2325, %v2410
    %v2438 = vsub.f32 %v2326, %v2412
    %v2439 = vsub.f32 %v2327, %v2414
    %v2440 = vsub.f32 %v2328, %v2416
    %v2441 = vsub.f32 %v2329, %v2418
    %v2442 = vsub.f32 %v2330, %v2420
    %v2443 = vsub.f32 %v2331, %v2422
    %v2444 = vsub.f32 %v2332, %v2424
    %v2445 = vsub.f32 %v2333, %v2426
    %v2446 = vsub.f32 %v2334, %v2428
    %v2447 = vsub.f32 %v2335, %v2430
    %v2448 = vsub.f32 %v2336, %v2432
    %2449 = vst [vmem:[%s5] sm:$0xff] %v2433
    %2450 = vst [vmem:[%s5 + $0x8] sm:$0xff] %v2434
    %2451 = vst [vmem:[%s5 + $0x10] sm:$0xff] %v2435
    %2452 = vst [vmem:[%s5 + $0x18] sm:$0xff] %v2436
    %2453 = vst [vmem:[%s5 + $0x20] sm:$0xff] %v2437
    %2454 = vst [vmem:[%s5 + $0x28] sm:$0xff] %v2438
    %2455 = vst [vmem:[%s5 + $0x30] sm:$0xff] %v2439
    %2456 = vst [vmem:[%s5 + $0x38] sm:$0xff] %v2440
    %2457 = vst [vmem:[%s5 + $0x40] sm:$0xff] %v2441
    %2458 = vst [vmem:[%s5 + $0x48] sm:$0xff] %v2442
    %2459 = vst [vmem:[%s5 + $0x50] sm:$0xff] %v2443
    %2460 = vst [vmem:[%s5 + $0x58] sm:$0xff] %v2444
    %2461 = vst [vmem:[%s5 + $0x60] sm:$0xff] %v2445
    %2462 = vst [vmem:[%s5 + $0x68] sm:$0xff] %v2446
    %2463 = vst [vmem:[%s5 + $0x70] sm:$0xff] %v2447
    %2464 = vst [vmem:[%s5 + $0x78] sm:$0xff] %v2448
    // Predicated region
    $region26: #{graphsage_forward.1} parent=1 // pred_check
      _
    $region27: #{graphsage_forward.1} parent=1 // pred_check_branch
      %2466 = sbr.rel (0) target = $region29
    $region28: #{graphsage_forward.1} parent=1 // pred_region
      _
    $region29: #{graphsage_forward.1} parent=1 // pred_fallthru
      _
    // Predicated region
    $region30: #{graphsage_forward.1} parent=1 // pred_check
      _
    $region31: #{graphsage_forward.1} parent=1 // pred_check_branch
      %2468 = sbr.rel (0) target = $region33
    $region32: #{graphsage_forward.1} parent=1 // pred_region
      _
    $region33: #{graphsage_forward.1} parent=1 // pred_fallthru
      _
    %2469 = vsyncpa [#allocation3], 1

</llo_original>
